<compile_context>
chip_gen: v5e
topology: v5e:2x2
jax: 0.10.0
libtpu: 0.0.40
codegen_flags: <defaults>
</compile_context>

<pallas_src>
import math

import jax
import jax.numpy as jnp
import numpy as np
from jax.experimental import pallas as pl
from jax.experimental.pallas import tpu as pltpu

# ---------------- model config (small, consistent with the module) ----------
B = 2          # batch
T = 8          # sequence length
D_MODEL = 32   # d_model
N_HEADS = 4    # n_heads
D_K = D_MODEL // N_HEADS
D_FF = 64      # d_ff
LN_EPS = 1e-12
NEG_INF = float(np.finfo(np.float32).min)   # same convention as neural_sp MHA

# ---------------- packed-parameter slab layout -------------------------------
# Weight slab (W_ROWS, W_COLS): column blocks hold each matrix.
COL_QKV = 0                          # (D, 3D)   fused [Wq | Wk | Wv]
COL_O = COL_QKV + 3 * D_MODEL        # (D, D)
COL_W1 = COL_O + D_MODEL             # (D, D_FF)
COL_W2 = COL_W1 + D_FF               # (D_FF, D)
W_COLS = ((COL_W2 + D_MODEL + 127) // 128) * 128     # pad to lane multiple
W_ROWS = ((max(D_MODEL, D_FF) + 7) // 8) * 8          # pad to sublane multiple

# Vector slab (8, 128): one row per bias / LN vector.
ROW_G1, ROW_BE1, ROW_BQKV, ROW_BO, ROW_G2, ROW_BE2, ROW_B1, ROW_B2 = range(8)
V_ROWS = 8
V_COLS = ((max(3 * D_MODEL, D_FF, D_MODEL) + 127) // 128) * 128   # 128


# ---------------------------- Pallas kernel ---------------------------------
def _encoder_block_kernel(xs_ref, mask_ref, w_ref, vec_ref, out_ref, aw_ref):
    x = xs_ref[...]                       # (BB, T, D) f32
    mask = mask_ref[...]                  # (BB, T, T) f32 (1 = keep, 0 = masked)
    BB, Tt, D = x.shape
    H, DK = N_HEADS, D // N_HEADS

    # ---- parameters: read once from the two slabs ----
    vec = vec_ref[...]                                   # (8, 128)
    g1 = vec[ROW_G1:ROW_G1 + 1, :D]                      # (1, D)
    be1 = vec[ROW_BE1:ROW_BE1 + 1, :D]
    b_qkv = vec[ROW_BQKV:ROW_BQKV + 1, :3 * D]           # (1, 3D)
    b_o = vec[ROW_BO:ROW_BO + 1, :D]
    g2 = vec[ROW_G2:ROW_G2 + 1, :D]
    be2 = vec[ROW_BE2:ROW_BE2 + 1, :D]
    b_1 = vec[ROW_B1:ROW_B1 + 1, :D_FF]                  # (1, D_FF)
    b_2 = vec[ROW_B2:ROW_B2 + 1, :D]

    w_qkv = w_ref[0:D, COL_QKV:COL_QKV + 3 * D]          # (D, 3D)
    w_o = w_ref[0:D, COL_O:COL_O + D]                    # (D, D)
    w_1 = w_ref[0:D, COL_W1:COL_W1 + D_FF]               # (D, D_FF)
    w_2 = w_ref[0:D_FF, COL_W2:COL_W2 + D]               # (D_FF, D)

    # ---- LayerNorm 1 (pre-norm) ----
    mean = jnp.mean(x, axis=-1, keepdims=True)
    var = jnp.mean((x - mean) ** 2, axis=-1, keepdims=True)
    xn = (x - mean) * jax.lax.rsqrt(var + LN_EPS) * g1 + be1      # (BB, T, D)

    # ---- fused Q/K/V projection: one matmul instead of three ----
    qkv = jnp.dot(xn.reshape(BB * Tt, D), w_qkv,
                  preferred_element_type=jnp.float32) + b_qkv     # (BB*T, 3D)

    scale = 1.0 / math.sqrt(DK)
    q_all = qkv[:, 0:D] * scale            # scale q once for all heads
    k_all = qkv[:, D:2 * D]
    v_all = qkv[:, 2 * D:3 * D]
    keep = mask > 0.0                      # (BB, T, T), shared by all heads

    aw_heads = []
    ctx_heads = []
    # TODO(synk): heads are statically unrolled (H=4); a single two-batch-dim
    # dot_general over (B, H) would remove the lane slices but is less
    # portable across Mosaic versions than the single-batch einsum below.
    for h in range(H):
        sl = slice(h * DK, (h + 1) * DK)
        qh = q_all[:, sl].reshape(BB, Tt, DK)
        kh = k_all[:, sl].reshape(BB, Tt, DK)
        vh = v_all[:, sl].reshape(BB, Tt, DK)
        e = jnp.einsum("bqd,bkd->bqk", qh, kh,
                       preferred_element_type=jnp.float32)        # (BB, T, T)
        e = jnp.where(keep, e, NEG_INF)
        m = jnp.max(e, axis=-1, keepdims=True)
        p = jnp.exp(e - m)
        aw_h = p / jnp.sum(p, axis=-1, keepdims=True)             # (BB, T, T)
        aw_heads.append(aw_h)
        ctx_heads.append(jnp.einsum("bqk,bkd->bqd", aw_h, vh,
                                    preferred_element_type=jnp.float32))

    # single lane-dense store (last dim = H*T = 32) for all attention weights
    aw_ref[...] = jnp.concatenate(aw_heads, axis=-1)              # (BB, T, H*T)

    ctx = jnp.concatenate(ctx_heads, axis=-1).reshape(BB * Tt, D)  # (BB*T, D)
    attn = jnp.dot(ctx, w_o, preferred_element_type=jnp.float32) + b_o
    xs1 = attn.reshape(BB, Tt, D) + x     # dropout = identity, + residual

    # ---- LayerNorm 2 + position-wise FFN (relu) ----
    mean2 = jnp.mean(xs1, axis=-1, keepdims=True)
    var2 = jnp.mean((xs1 - mean2) ** 2, axis=-1, keepdims=True)
    xn2 = (xs1 - mean2) * jax.lax.rsqrt(var2 + LN_EPS) * g2 + be2

    h1 = jnp.dot(xn2.reshape(BB * Tt, D), w_1,
                 preferred_element_type=jnp.float32) + b_1
    h1 = jnp.maximum(h1, 0.0)
    ffn = jnp.dot(h1, w_2, preferred_element_type=jnp.float32) + b_2
    out_ref[...] = ffn.reshape(BB, Tt, D) + xs1   # dropout = identity + residual


# ------------------------------ param packing --------------------------------
def pack_params(params):
    """Pack the 16 per-layer parameters into (weight_slab, vector_slab)."""
    (g1, be1, wq, bq, wk, bk, wv, bv, wo, bo, g2, be2, w1, b1, w2, b2) = params

    w_slab = jnp.zeros((W_ROWS, W_COLS), jnp.float32)
    w_slab = w_slab.at[:D_MODEL, COL_QKV:COL_QKV + 3 * D_MODEL].set(
        jnp.concatenate([wq, wk, wv], axis=1))
    w_slab = w_slab.at[:D_MODEL, COL_O:COL_O + D_MODEL].set(wo)
    w_slab = w_slab.at[:D_MODEL, COL_W1:COL_W1 + D_FF].set(w1)
    w_slab = w_slab.at[:D_FF, COL_W2:COL_W2 + D_MODEL].set(w2)

    vec_slab = jnp.zeros((V_ROWS, V_COLS), jnp.float32)
    vec_slab = vec_slab.at[ROW_G1, :D_MODEL].set(g1[0])
    vec_slab = vec_slab.at[ROW_BE1, :D_MODEL].set(be1[0])
    vec_slab = vec_slab.at[ROW_BQKV, :3 * D_MODEL].set(
        jnp.concatenate([bq, bk, bv], axis=1)[0])
    vec_slab = vec_slab.at[ROW_BO, :D_MODEL].set(bo[0])
    vec_slab = vec_slab.at[ROW_G2, :D_MODEL].set(g2[0])
    vec_slab = vec_slab.at[ROW_BE2, :D_MODEL].set(be2[0])
    vec_slab = vec_slab.at[ROW_B1, :D_FF].set(b1[0])
    vec_slab = vec_slab.at[ROW_B2, :D_MODEL].set(b2[0])
    return w_slab, vec_slab


# ------------------------------ wrapper --------------------------------------
def transformer_encoder_block(xs, xx_mask, params, *, batch_block=None):
    """xs: [B, T, d_model] f32, xx_mask: [B, T, T] f32 (1=keep, 0=mask).

    Returns (out [B, T, d_model], attention weights [B, H, T, T]).
    """
    Bb, Tt, Dd = xs.shape
    H = N_HEADS
    if batch_block is None:
        # Default: fold the whole batch into ONE grid step (best on the
        # single-TensorCore v5e/v6e).  On v7x (2 TCs/chip) pass
        # batch_block = Bb // 2 so the "parallel" batch axis spreads over cores.
        batch_block = Bb
    assert Bb % batch_block == 0
    grid = (Bb // batch_block,)

    w_slab, vec_slab = pack_params(params)

    out, aw_dense = pl.pallas_call(
        _encoder_block_kernel,
        grid=grid,
        in_specs=[
            pl.BlockSpec((batch_block, Tt, Dd), lambda b: (b, 0, 0)),
            pl.BlockSpec((batch_block, Tt, Tt), lambda b: (b, 0, 0)),
            pl.BlockSpec((W_ROWS, W_COLS), lambda b: (0, 0)),
            pl.BlockSpec((V_ROWS, V_COLS), lambda b: (0, 0)),
        ],
        out_specs=(
            pl.BlockSpec((batch_block, Tt, Dd), lambda b: (b, 0, 0)),
            pl.BlockSpec((batch_block, Tt, H * Tt), lambda b: (b, 0, 0)),
        ),
        out_shape=(
            jax.ShapeDtypeStruct((Bb, Tt, Dd), jnp.float32),
            jax.ShapeDtypeStruct((Bb, Tt, H * Tt), jnp.float32),
        ),
        compiler_params=pltpu.CompilerParams(
            dimension_semantics=("parallel",)),
    )(xs, xx_mask, w_slab, vec_slab)

    # Free layout plumbing outside the kernel: (B, T, H*T) -> [B, H, T, T].
    aws = aw_dense.reshape(Bb, Tt, H, Tt).transpose(0, 2, 1, 3)
    return out, aws


# ------------------------ pure-JAX reference ---------------------------------
def _ref_forward(xs, mask, params):
    (g1, be1, wq, bq, wk, bk, wv, bv, wo, bo, g2, be2, w1, b1, w2, b2) = params

    def ln(x, g, b):
        m = jnp.mean(x, -1, keepdims=True)
        v = jnp.mean((x - m) ** 2, -1, keepdims=True)
        return (x - m) * jax.lax.rsqrt(v + LN_EPS) * g + b

    residual = xs
    xn = ln(xs, g1[0], be1[0])
    q = xn @ wq + bq[0]
    k = xn @ wk + bk[0]
    v = xn @ wv + bv[0]
    q = q.reshape(B, T, N_HEADS, D_K).transpose(0, 2, 1, 3)
    k = k.reshape(B, T, N_HEADS, D_K).transpose(0, 2, 1, 3)
    v = v.reshape(B, T, N_HEADS, D_K).transpose(0, 2, 1, 3)
    e = jnp.einsum("bhqd,bhkd->bhqk", q, k) / math.sqrt(D_K)
    e = jnp.where(mask[:, None] > 0, e, NEG_INF)
    aw = jax.nn.softmax(e, axis=-1)
    ctx = jnp.einsum("bhqk,bhkd->bhqd", aw, v)
    ctx = ctx.transpose(0, 2, 1, 3).reshape(B, T, D_MODEL)
    xs1 = ctx @ wo + bo[0] + residual

    residual = xs1
    xn2 = ln(xs1, g2[0], be2[0])
    h = jnp.maximum(xn2 @ w1 + b1[0], 0.0)
    out = h @ w2 + b2[0] + residual
    return out, aw


# --------------------------------- main ---------------------------------------
if __name__ == "__main__":
    key = jax.random.PRNGKey(0)
    keys = jax.random.split(key, 16)

    xs = jax.random.normal(keys[0], (B, T, D_MODEL), dtype=jnp.float32)

    # key-padding style mask: batch 0 keeps all T keys, batch 1 keeps 6.
    lens = jnp.array([T, 6], dtype=jnp.int32)
    key_pos = jnp.arange(T, dtype=jnp.int32)
    xx_mask = (key_pos[None, None, :] < lens[:, None, None]).astype(jnp.float32)
    xx_mask = jnp.broadcast_to(xx_mask, (B, T, T))

    def w(k, shape, s=0.05):
        return jax.random.normal(k, shape, dtype=jnp.float32) * s

    params = (
        1.0 + 0.1 * jax.random.normal(keys[1], (1, D_MODEL), dtype=jnp.float32),  # LN1 gamma
        0.1 * jax.random.normal(keys[2], (1, D_MODEL), dtype=jnp.float32),        # LN1 beta
        w(keys[3], (D_MODEL, D_MODEL)), w(keys[4], (1, D_MODEL)),                 # Wq, bq
        w(keys[5], (D_MODEL, D_MODEL)), w(keys[6], (1, D_MODEL)),                 # Wk, bk
        w(keys[7], (D_MODEL, D_MODEL)), w(keys[8], (1, D_MODEL)),                 # Wv, bv
        w(keys[9], (D_MODEL, D_MODEL)), w(keys[10], (1, D_MODEL)),                # Wo, bo
        1.0 + 0.1 * jax.random.normal(keys[11], (1, D_MODEL), dtype=jnp.float32), # LN2 gamma
        0.1 * jax.random.normal(keys[12], (1, D_MODEL), dtype=jnp.float32),       # LN2 beta
        w(keys[13], (D_MODEL, D_FF)), w(keys[14], (1, D_FF)),                     # FFN W1, b1
        w(keys[15], (D_FF, D_MODEL)), w(keys[0], (1, D_MODEL)),                   # FFN W2, b2
    )

    out, aws = transformer_encoder_block(xs, xx_mask, params)
    out = jax.block_until_ready(out)
    aws = jax.block_until_ready(aws)

    ref_out, ref_aws = _ref_forward(xs, xx_mask, params)
    assert out.shape == (B, T, D_MODEL) and aws.shape == (B, N_HEADS, T, T)
    np.testing.assert_allclose(np.asarray(out), np.asarray(ref_out),
                               rtol=1e-4, atol=1e-4)
    np.testing.assert_allclose(np.asarray(aws), np.asarray(ref_aws),
                               rtol=1e-4, atol=1e-4)

    print("KERNEL_OK")
</pallas_src>

<mosaic_0001>
module attributes {stable_mosaic.version = 11 : i64} {
  func.func @_encoder_block_kernel(%arg0: i32, %arg1: memref<2x8x32xf32, #tpu.memory_space<vmem>>, %arg2: memref<2x8x8xf32, #tpu.memory_space<vmem>>, %arg3: memref<64x256xf32, #tpu.memory_space<vmem>>, %arg4: memref<8x128xf32, #tpu.memory_space<vmem>>, %arg5: memref<2x8x32xf32, #tpu.memory_space<vmem>>, %arg6: memref<2x8x32xf32, #tpu.memory_space<vmem>>) attributes {dimension_semantics = [#tpu.dimension_semantics<parallel>], iteration_bounds = array<i64: 1>, scalar_prefetch = 0 : i64, scratch_operands = 0 : i64, tpu.core_type = #tpu.core_type<tc>, window_params = [{transform_indices = @transform_0, window_bounds = array<i64: 2, 8, 32>}, {transform_indices = @transform_1, window_bounds = array<i64: 2, 8, 8>}, {pipeline_mode = #tpu.pipeline_mode<synchronous>, transform_indices = @transform_2, window_bounds = array<i64: 64, 256>}, {pipeline_mode = #tpu.pipeline_mode<synchronous>, transform_indices = @transform_3, window_bounds = array<i64: 8, 128>}, {transform_indices = @transform_4, window_bounds = array<i64: 2, 8, 32>}, {transform_indices = @transform_5, window_bounds = array<i64: 2, 8, 32>}]} {
    %c0 = arith.constant 0 : index
    %c0_0 = arith.constant 0 : index
    %c0_1 = arith.constant 0 : index
    %0 = vector.load %arg1[%c0, %c0_0, %c0_1] : memref<2x8x32xf32, #tpu.memory_space<vmem>>, vector<2x8x32xf32>
    %c0_2 = arith.constant 0 : index
    %c0_3 = arith.constant 0 : index
    %c0_4 = arith.constant 0 : index
    %1 = vector.load %arg2[%c0_2, %c0_3, %c0_4] : memref<2x8x8xf32, #tpu.memory_space<vmem>>, vector<2x8x8xf32>
    %c0_5 = arith.constant 0 : index
    %c0_6 = arith.constant 0 : index
    %2 = vector.load %arg4[%c0_5, %c0_6] : memref<8x128xf32, #tpu.memory_space<vmem>>, vector<8x128xf32>
    %3 = vector.extract_strided_slice %2 {offsets = [0, 0], sizes = [1, 32], strides = [1, 1]} : vector<8x128xf32> to vector<1x32xf32>
    %4 = vector.extract_strided_slice %2 {offsets = [1, 0], sizes = [1, 32], strides = [1, 1]} : vector<8x128xf32> to vector<1x32xf32>
    %5 = vector.extract_strided_slice %2 {offsets = [2, 0], sizes = [1, 96], strides = [1, 1]} : vector<8x128xf32> to vector<1x96xf32>
    %6 = vector.extract_strided_slice %2 {offsets = [3, 0], sizes = [1, 32], strides = [1, 1]} : vector<8x128xf32> to vector<1x32xf32>
    %7 = vector.extract_strided_slice %2 {offsets = [4, 0], sizes = [1, 32], strides = [1, 1]} : vector<8x128xf32> to vector<1x32xf32>
    %8 = vector.extract_strided_slice %2 {offsets = [5, 0], sizes = [1, 32], strides = [1, 1]} : vector<8x128xf32> to vector<1x32xf32>
    %9 = vector.extract_strided_slice %2 {offsets = [6, 0], sizes = [1, 64], strides = [1, 1]} : vector<8x128xf32> to vector<1x64xf32>
    %10 = vector.extract_strided_slice %2 {offsets = [7, 0], sizes = [1, 32], strides = [1, 1]} : vector<8x128xf32> to vector<1x32xf32>
    %c0_7 = arith.constant 0 : index
    %c0_8 = arith.constant 0 : index
    %11 = vector.load %arg3[%c0_7, %c0_8] : memref<64x256xf32, #tpu.memory_space<vmem>>, vector<32x96xf32>
    %c0_9 = arith.constant 0 : index
    %c96 = arith.constant 96 : index
    %12 = vector.load %arg3[%c0_9, %c96] : memref<64x256xf32, #tpu.memory_space<vmem>>, vector<32x32xf32>
    %c0_10 = arith.constant 0 : index
    %c128 = arith.constant 128 : index
    %13 = vector.load %arg3[%c0_10, %c128] : memref<64x256xf32, #tpu.memory_space<vmem>>, vector<32x64xf32>
    %c0_11 = arith.constant 0 : index
    %c192 = arith.constant 192 : index
    %14 = vector.load %arg3[%c0_11, %c192] : memref<64x256xf32, #tpu.memory_space<vmem>>, vector<64x32xf32>
    %cst = arith.constant dense<0.000000e+00> : vector<2x8xf32>
    %15 = vector.multi_reduction <add>, %0, %cst [2] : vector<2x8x32xf32> to vector<2x8xf32>
    %16 = vector.shape_cast %15 : vector<2x8xf32> to vector<2x8x1xf32>
    %cst_12 = arith.constant 3.200000e+01 : f32
    %17 = vector.broadcast %cst_12 : f32 to vector<2x8x1xf32>
    %18 = arith.divf %16, %17 : vector<2x8x1xf32>
    %19 = vector.broadcast %18 : vector<2x8x1xf32> to vector<2x8x32xf32>
    %20 = arith.subf %0, %19 : vector<2x8x32xf32>
    %21 = arith.mulf %20, %20 : vector<2x8x32xf32>
    %cst_13 = arith.constant dense<0.000000e+00> : vector<2x8xf32>
    %22 = vector.multi_reduction <add>, %21, %cst_13 [2] : vector<2x8x32xf32> to vector<2x8xf32>
    %23 = vector.shape_cast %22 : vector<2x8xf32> to vector<2x8x1xf32>
    %cst_14 = arith.constant 3.200000e+01 : f32
    %24 = vector.broadcast %cst_14 : f32 to vector<2x8x1xf32>
    %25 = arith.divf %23, %24 : vector<2x8x1xf32>
    %26 = vector.broadcast %18 : vector<2x8x1xf32> to vector<2x8x32xf32>
    %27 = arith.subf %0, %26 : vector<2x8x32xf32>
    %cst_15 = arith.constant 9.99999996E-13 : f32
    %28 = vector.broadcast %cst_15 : f32 to vector<2x8x1xf32>
    %29 = arith.addf %25, %28 : vector<2x8x1xf32>
    %30 = math.rsqrt %29 : vector<2x8x1xf32>
    %31 = vector.broadcast %30 : vector<2x8x1xf32> to vector<2x8x32xf32>
    %32 = arith.mulf %27, %31 : vector<2x8x32xf32>
    %33 = vector.shape_cast %3 : vector<1x32xf32> to vector<1x1x32xf32>
    %34 = vector.broadcast %33 : vector<1x1x32xf32> to vector<2x8x32xf32>
    %35 = arith.mulf %32, %34 : vector<2x8x32xf32>
    %36 = vector.shape_cast %4 : vector<1x32xf32> to vector<1x1x32xf32>
    %37 = vector.broadcast %36 : vector<1x1x32xf32> to vector<2x8x32xf32>
    %38 = arith.addf %35, %37 : vector<2x8x32xf32>
    %39 = vector.shape_cast %38 : vector<2x8x32xf32> to vector<16x32xf32>
    %cst_16 = arith.constant dense<0.000000e+00> : vector<16x96xf32>
    %40 = tpu.matmul %39, %11, %cst_16 {dimension_numbers = #tpu.dot_dimension_numbers<[1], [0], [0], [1], [0, 0, 1, 1], [], []>} : vector<16x32xf32>, vector<32x96xf32>, vector<16x96xf32> -> vector<16x96xf32>
    %41 = vector.broadcast %5 : vector<1x96xf32> to vector<16x96xf32>
    %42 = arith.addf %40, %41 : vector<16x96xf32>
    %43 = vector.extract_strided_slice %42 {offsets = [0, 0], sizes = [16, 32], strides = [1, 1]} : vector<16x96xf32> to vector<16x32xf32>
    %cst_17 = arith.constant 0.353553385 : f32
    %44 = vector.broadcast %cst_17 : f32 to vector<16x32xf32>
    %45 = arith.mulf %43, %44 : vector<16x32xf32>
    %46 = vector.extract_strided_slice %42 {offsets = [0, 32], sizes = [16, 32], strides = [1, 1]} : vector<16x96xf32> to vector<16x32xf32>
    %47 = vector.extract_strided_slice %42 {offsets = [0, 64], sizes = [16, 32], strides = [1, 1]} : vector<16x96xf32> to vector<16x32xf32>
    %cst_18 = arith.constant 0.000000e+00 : f32
    %48 = vector.broadcast %cst_18 : f32 to vector<2x8x8xf32>
    %49 = arith.cmpf ogt, %1, %48 : vector<2x8x8xf32>
    %50 = vector.extract_strided_slice %45 {offsets = [0, 0], sizes = [16, 8], strides = [1, 1]} : vector<16x32xf32> to vector<16x8xf32>
    %51 = vector.shape_cast %50 : vector<16x8xf32> to vector<2x8x8xf32>
    %52 = vector.extract_strided_slice %46 {offsets = [0, 0], sizes = [16, 8], strides = [1, 1]} : vector<16x32xf32> to vector<16x8xf32>
    %53 = vector.shape_cast %52 : vector<16x8xf32> to vector<2x8x8xf32>
    %54 = vector.extract_strided_slice %47 {offsets = [0, 0], sizes = [16, 8], strides = [1, 1]} : vector<16x32xf32> to vector<16x8xf32>
    %55 = vector.shape_cast %54 : vector<16x8xf32> to vector<2x8x8xf32>
    "tpu.trace_start"() <{level = 10 : i32, message = "bqd,bkd->bqk"}> : () -> ()
    %cst_19 = arith.constant dense<0.000000e+00> : vector<2x8x8xf32>
    %56 = tpu.matmul %51, %53, %cst_19 {dimension_numbers = #tpu.dot_dimension_numbers<[2], [2], [1], [1], [0, 0, 0, 1, 1, 1], [0], [0]>} : vector<2x8x8xf32>, vector<2x8x8xf32>, vector<2x8x8xf32> -> vector<2x8x8xf32>
    %cst_20 = arith.constant -3.40282347E+38 : f32
    "tpu.trace_stop"() : () -> ()
    %57 = vector.broadcast %cst_20 : f32 to vector<2x8x8xf32>
    %58 = arith.select %49, %56, %57 : vector<2x8x8xi1>, vector<2x8x8xf32>
    %cst_21 = arith.constant dense<0xFF800000> : vector<2x8xf32>
    %59 = vector.multi_reduction <maximumf>, %58, %cst_21 [2] : vector<2x8x8xf32> to vector<2x8xf32>
    %60 = vector.shape_cast %59 : vector<2x8xf32> to vector<2x8x1xf32>
    %61 = vector.broadcast %60 : vector<2x8x1xf32> to vector<2x8x8xf32>
    %62 = arith.subf %58, %61 : vector<2x8x8xf32>
    %63 = math.exp %62 : vector<2x8x8xf32>
    %cst_22 = arith.constant dense<0.000000e+00> : vector<2x8xf32>
    %64 = vector.multi_reduction <add>, %63, %cst_22 [2] : vector<2x8x8xf32> to vector<2x8xf32>
    %65 = vector.shape_cast %64 : vector<2x8xf32> to vector<2x8x1xf32>
    %66 = vector.broadcast %65 : vector<2x8x1xf32> to vector<2x8x8xf32>
    %67 = arith.divf %63, %66 : vector<2x8x8xf32>
    "tpu.trace_start"() <{level = 10 : i32, message = "bqk,bkd->bqd"}> : () -> ()
    %cst_23 = arith.constant dense<0.000000e+00> : vector<2x8x8xf32>
    %68 = tpu.matmul %67, %55, %cst_23 {dimension_numbers = #tpu.dot_dimension_numbers<[2], [1], [1], [2], [0, 0, 0, 1, 1, 2], [0], [0]>} : vector<2x8x8xf32>, vector<2x8x8xf32>, vector<2x8x8xf32> -> vector<2x8x8xf32>
    "tpu.trace_stop"() : () -> ()
    %69 = vector.extract_strided_slice %45 {offsets = [0, 8], sizes = [16, 8], strides = [1, 1]} : vector<16x32xf32> to vector<16x8xf32>
    %70 = vector.shape_cast %69 : vector<16x8xf32> to vector<2x8x8xf32>
    %71 = vector.extract_strided_slice %46 {offsets = [0, 8], sizes = [16, 8], strides = [1, 1]} : vector<16x32xf32> to vector<16x8xf32>
    %72 = vector.shape_cast %71 : vector<16x8xf32> to vector<2x8x8xf32>
    %73 = vector.extract_strided_slice %47 {offsets = [0, 8], sizes = [16, 8], strides = [1, 1]} : vector<16x32xf32> to vector<16x8xf32>
    %74 = vector.shape_cast %73 : vector<16x8xf32> to vector<2x8x8xf32>
    "tpu.trace_start"() <{level = 10 : i32, message = "bqd,bkd->bqk"}> : () -> ()
    %cst_24 = arith.constant dense<0.000000e+00> : vector<2x8x8xf32>
    %75 = tpu.matmul %70, %72, %cst_24 {dimension_numbers = #tpu.dot_dimension_numbers<[2], [2], [1], [1], [0, 0, 0, 1, 1, 1], [0], [0]>} : vector<2x8x8xf32>, vector<2x8x8xf32>, vector<2x8x8xf32> -> vector<2x8x8xf32>
    %cst_25 = arith.constant -3.40282347E+38 : f32
    "tpu.trace_stop"() : () -> ()
    %76 = vector.broadcast %cst_25 : f32 to vector<2x8x8xf32>
    %77 = arith.select %49, %75, %76 : vector<2x8x8xi1>, vector<2x8x8xf32>
    %cst_26 = arith.constant dense<0xFF800000> : vector<2x8xf32>
    %78 = vector.multi_reduction <maximumf>, %77, %cst_26 [2] : vector<2x8x8xf32> to vector<2x8xf32>
    %79 = vector.shape_cast %78 : vector<2x8xf32> to vector<2x8x1xf32>
    %80 = vector.broadcast %79 : vector<2x8x1xf32> to vector<2x8x8xf32>
    %81 = arith.subf %77, %80 : vector<2x8x8xf32>
    %82 = math.exp %81 : vector<2x8x8xf32>
    %cst_27 = arith.constant dense<0.000000e+00> : vector<2x8xf32>
    %83 = vector.multi_reduction <add>, %82, %cst_27 [2] : vector<2x8x8xf32> to vector<2x8xf32>
    %84 = vector.shape_cast %83 : vector<2x8xf32> to vector<2x8x1xf32>
    %85 = vector.broadcast %84 : vector<2x8x1xf32> to vector<2x8x8xf32>
    %86 = arith.divf %82, %85 : vector<2x8x8xf32>
    "tpu.trace_start"() <{level = 10 : i32, message = "bqk,bkd->bqd"}> : () -> ()
    %cst_28 = arith.constant dense<0.000000e+00> : vector<2x8x8xf32>
    %87 = tpu.matmul %86, %74, %cst_28 {dimension_numbers = #tpu.dot_dimension_numbers<[2], [1], [1], [2], [0, 0, 0, 1, 1, 2], [0], [0]>} : vector<2x8x8xf32>, vector<2x8x8xf32>, vector<2x8x8xf32> -> vector<2x8x8xf32>
    "tpu.trace_stop"() : () -> ()
    %88 = vector.extract_strided_slice %45 {offsets = [0, 16], sizes = [16, 8], strides = [1, 1]} : vector<16x32xf32> to vector<16x8xf32>
    %89 = vector.shape_cast %88 : vector<16x8xf32> to vector<2x8x8xf32>
    %90 = vector.extract_strided_slice %46 {offsets = [0, 16], sizes = [16, 8], strides = [1, 1]} : vector<16x32xf32> to vector<16x8xf32>
    %91 = vector.shape_cast %90 : vector<16x8xf32> to vector<2x8x8xf32>
    %92 = vector.extract_strided_slice %47 {offsets = [0, 16], sizes = [16, 8], strides = [1, 1]} : vector<16x32xf32> to vector<16x8xf32>
    %93 = vector.shape_cast %92 : vector<16x8xf32> to vector<2x8x8xf32>
    "tpu.trace_start"() <{level = 10 : i32, message = "bqd,bkd->bqk"}> : () -> ()
    %cst_29 = arith.constant dense<0.000000e+00> : vector<2x8x8xf32>
    %94 = tpu.matmul %89, %91, %cst_29 {dimension_numbers = #tpu.dot_dimension_numbers<[2], [2], [1], [1], [0, 0, 0, 1, 1, 1], [0], [0]>} : vector<2x8x8xf32>, vector<2x8x8xf32>, vector<2x8x8xf32> -> vector<2x8x8xf32>
    %cst_30 = arith.constant -3.40282347E+38 : f32
    "tpu.trace_stop"() : () -> ()
    %95 = vector.broadcast %cst_30 : f32 to vector<2x8x8xf32>
    %96 = arith.select %49, %94, %95 : vector<2x8x8xi1>, vector<2x8x8xf32>
    %cst_31 = arith.constant dense<0xFF800000> : vector<2x8xf32>
    %97 = vector.multi_reduction <maximumf>, %96, %cst_31 [2] : vector<2x8x8xf32> to vector<2x8xf32>
    %98 = vector.shape_cast %97 : vector<2x8xf32> to vector<2x8x1xf32>
    %99 = vector.broadcast %98 : vector<2x8x1xf32> to vector<2x8x8xf32>
    %100 = arith.subf %96, %99 : vector<2x8x8xf32>
    %101 = math.exp %100 : vector<2x8x8xf32>
    %cst_32 = arith.constant dense<0.000000e+00> : vector<2x8xf32>
    %102 = vector.multi_reduction <add>, %101, %cst_32 [2] : vector<2x8x8xf32> to vector<2x8xf32>
    %103 = vector.shape_cast %102 : vector<2x8xf32> to vector<2x8x1xf32>
    %104 = vector.broadcast %103 : vector<2x8x1xf32> to vector<2x8x8xf32>
    %105 = arith.divf %101, %104 : vector<2x8x8xf32>
    "tpu.trace_start"() <{level = 10 : i32, message = "bqk,bkd->bqd"}> : () -> ()
    %cst_33 = arith.constant dense<0.000000e+00> : vector<2x8x8xf32>
    %106 = tpu.matmul %105, %93, %cst_33 {dimension_numbers = #tpu.dot_dimension_numbers<[2], [1], [1], [2], [0, 0, 0, 1, 1, 2], [0], [0]>} : vector<2x8x8xf32>, vector<2x8x8xf32>, vector<2x8x8xf32> -> vector<2x8x8xf32>
    "tpu.trace_stop"() : () -> ()
    %107 = vector.extract_strided_slice %45 {offsets = [0, 24], sizes = [16, 8], strides = [1, 1]} : vector<16x32xf32> to vector<16x8xf32>
    %108 = vector.shape_cast %107 : vector<16x8xf32> to vector<2x8x8xf32>
    %109 = vector.extract_strided_slice %46 {offsets = [0, 24], sizes = [16, 8], strides = [1, 1]} : vector<16x32xf32> to vector<16x8xf32>
    %110 = vector.shape_cast %109 : vector<16x8xf32> to vector<2x8x8xf32>
    %111 = vector.extract_strided_slice %47 {offsets = [0, 24], sizes = [16, 8], strides = [1, 1]} : vector<16x32xf32> to vector<16x8xf32>
    %112 = vector.shape_cast %111 : vector<16x8xf32> to vector<2x8x8xf32>
    "tpu.trace_start"() <{level = 10 : i32, message = "bqd,bkd->bqk"}> : () -> ()
    %cst_34 = arith.constant dense<0.000000e+00> : vector<2x8x8xf32>
    %113 = tpu.matmul %108, %110, %cst_34 {dimension_numbers = #tpu.dot_dimension_numbers<[2], [2], [1], [1], [0, 0, 0, 1, 1, 1], [0], [0]>} : vector<2x8x8xf32>, vector<2x8x8xf32>, vector<2x8x8xf32> -> vector<2x8x8xf32>
    %cst_35 = arith.constant -3.40282347E+38 : f32
    "tpu.trace_stop"() : () -> ()
    %114 = vector.broadcast %cst_35 : f32 to vector<2x8x8xf32>
    %115 = arith.select %49, %113, %114 : vector<2x8x8xi1>, vector<2x8x8xf32>
    %cst_36 = arith.constant dense<0xFF800000> : vector<2x8xf32>
    %116 = vector.multi_reduction <maximumf>, %115, %cst_36 [2] : vector<2x8x8xf32> to vector<2x8xf32>
    %117 = vector.shape_cast %116 : vector<2x8xf32> to vector<2x8x1xf32>
    %118 = vector.broadcast %117 : vector<2x8x1xf32> to vector<2x8x8xf32>
    %119 = arith.subf %115, %118 : vector<2x8x8xf32>
    %120 = math.exp %119 : vector<2x8x8xf32>
    %cst_37 = arith.constant dense<0.000000e+00> : vector<2x8xf32>
    %121 = vector.multi_reduction <add>, %120, %cst_37 [2] : vector<2x8x8xf32> to vector<2x8xf32>
    %122 = vector.shape_cast %121 : vector<2x8xf32> to vector<2x8x1xf32>
    %123 = vector.broadcast %122 : vector<2x8x1xf32> to vector<2x8x8xf32>
    %124 = arith.divf %120, %123 : vector<2x8x8xf32>
    "tpu.trace_start"() <{level = 10 : i32, message = "bqk,bkd->bqd"}> : () -> ()
    %cst_38 = arith.constant dense<0.000000e+00> : vector<2x8x8xf32>
    %125 = tpu.matmul %124, %112, %cst_38 {dimension_numbers = #tpu.dot_dimension_numbers<[2], [1], [1], [2], [0, 0, 0, 1, 1, 2], [0], [0]>} : vector<2x8x8xf32>, vector<2x8x8xf32>, vector<2x8x8xf32> -> vector<2x8x8xf32>
    "tpu.trace_stop"() : () -> ()
    %126 = tpu.concatenate %67, %86, %105, %124 in 2 : vector<2x8x8xf32>, vector<2x8x8xf32>, vector<2x8x8xf32>, vector<2x8x8xf32> -> vector<2x8x32xf32>
    %c0_39 = arith.constant 0 : index
    %c0_40 = arith.constant 0 : index
    %c0_41 = arith.constant 0 : index
    %127 = vector.load %arg6[%c0_39, %c0_40, %c0_41] : memref<2x8x32xf32, #tpu.memory_space<vmem>>, vector<2x8x32xf32>
    tpu.vector_store %arg6[%c0_39, %c0_40, %c0_41], %126 {strides = array<i32>} : memref<2x8x32xf32, #tpu.memory_space<vmem>>, vector<2x8x32xf32>,
    %128 = tpu.concatenate %68, %87, %106, %125 in 2 : vector<2x8x8xf32>, vector<2x8x8xf32>, vector<2x8x8xf32>, vector<2x8x8xf32> -> vector<2x8x32xf32>
    %129 = vector.shape_cast %128 : vector<2x8x32xf32> to vector<16x32xf32>
    %cst_42 = arith.constant dense<0.000000e+00> : vector<16x32xf32>
    %130 = tpu.matmul %129, %12, %cst_42 {dimension_numbers = #tpu.dot_dimension_numbers<[1], [0], [0], [1], [0, 0, 1, 1], [], []>} : vector<16x32xf32>, vector<32x32xf32>, vector<16x32xf32> -> vector<16x32xf32>
    %131 = vector.broadcast %6 : vector<1x32xf32> to vector<16x32xf32>
    %132 = arith.addf %130, %131 : vector<16x32xf32>
    %133 = vector.shape_cast %132 : vector<16x32xf32> to vector<2x8x32xf32>
    %134 = arith.addf %133, %0 : vector<2x8x32xf32>
    %cst_43 = arith.constant dense<0.000000e+00> : vector<2x8xf32>
    %135 = vector.multi_reduction <add>, %134, %cst_43 [2] : vector<2x8x32xf32> to vector<2x8xf32>
    %136 = vector.shape_cast %135 : vector<2x8xf32> to vector<2x8x1xf32>
    %cst_44 = arith.constant 3.200000e+01 : f32
    %137 = vector.broadcast %cst_44 : f32 to vector<2x8x1xf32>
    %138 = arith.divf %136, %137 : vector<2x8x1xf32>
    %139 = vector.broadcast %138 : vector<2x8x1xf32> to vector<2x8x32xf32>
    %140 = arith.subf %134, %139 : vector<2x8x32xf32>
    %141 = arith.mulf %140, %140 : vector<2x8x32xf32>
    %cst_45 = arith.constant dense<0.000000e+00> : vector<2x8xf32>
    %142 = vector.multi_reduction <add>, %141, %cst_45 [2] : vector<2x8x32xf32> to vector<2x8xf32>
    %143 = vector.shape_cast %142 : vector<2x8xf32> to vector<2x8x1xf32>
    %cst_46 = arith.constant 3.200000e+01 : f32
    %144 = vector.broadcast %cst_46 : f32 to vector<2x8x1xf32>
    %145 = arith.divf %143, %144 : vector<2x8x1xf32>
    %146 = vector.broadcast %138 : vector<2x8x1xf32> to vector<2x8x32xf32>
    %147 = arith.subf %134, %146 : vector<2x8x32xf32>
    %cst_47 = arith.constant 9.99999996E-13 : f32
    %148 = vector.broadcast %cst_47 : f32 to vector<2x8x1xf32>
    %149 = arith.addf %145, %148 : vector<2x8x1xf32>
    %150 = math.rsqrt %149 : vector<2x8x1xf32>
    %151 = vector.broadcast %150 : vector<2x8x1xf32> to vector<2x8x32xf32>
    %152 = arith.mulf %147, %151 : vector<2x8x32xf32>
    %153 = vector.shape_cast %7 : vector<1x32xf32> to vector<1x1x32xf32>
    %154 = vector.broadcast %153 : vector<1x1x32xf32> to vector<2x8x32xf32>
    %155 = arith.mulf %152, %154 : vector<2x8x32xf32>
    %156 = vector.shape_cast %8 : vector<1x32xf32> to vector<1x1x32xf32>
    %157 = vector.broadcast %156 : vector<1x1x32xf32> to vector<2x8x32xf32>
    %158 = arith.addf %155, %157 : vector<2x8x32xf32>
    %159 = vector.shape_cast %158 : vector<2x8x32xf32> to vector<16x32xf32>
    %cst_48 = arith.constant dense<0.000000e+00> : vector<16x64xf32>
    %160 = tpu.matmul %159, %13, %cst_48 {dimension_numbers = #tpu.dot_dimension_numbers<[1], [0], [0], [1], [0, 0, 1, 1], [], []>} : vector<16x32xf32>, vector<32x64xf32>, vector<16x64xf32> -> vector<16x64xf32>
    %161 = vector.broadcast %9 : vector<1x64xf32> to vector<16x64xf32>
    %162 = arith.addf %160, %161 : vector<16x64xf32>
    %cst_49 = arith.constant 0.000000e+00 : f32
    %163 = vector.broadcast %cst_49 : f32 to vector<16x64xf32>
    %164 = arith.maximumf %162, %163 : vector<16x64xf32>
    %cst_50 = arith.constant dense<0.000000e+00> : vector<16x32xf32>
    %165 = tpu.matmul %164, %14, %cst_50 {dimension_numbers = #tpu.dot_dimension_numbers<[1], [0], [0], [1], [0, 0, 1, 1], [], []>} : vector<16x64xf32>, vector<64x32xf32>, vector<16x32xf32> -> vector<16x32xf32>
    %166 = vector.broadcast %10 : vector<1x32xf32> to vector<16x32xf32>
    %167 = arith.addf %165, %166 : vector<16x32xf32>
    %168 = vector.shape_cast %167 : vector<16x32xf32> to vector<2x8x32xf32>
    %169 = arith.addf %168, %134 : vector<2x8x32xf32>
    %c0_51 = arith.constant 0 : index
    %c0_52 = arith.constant 0 : index
    %c0_53 = arith.constant 0 : index
    %170 = vector.load %arg5[%c0_51, %c0_52, %c0_53] : memref<2x8x32xf32, #tpu.memory_space<vmem>>, vector<2x8x32xf32>
    tpu.vector_store %arg5[%c0_51, %c0_52, %c0_53], %169 {strides = array<i32>} : memref<2x8x32xf32, #tpu.memory_space<vmem>>, vector<2x8x32xf32>,
    return
  }
  func.func @transform_0(%arg0: i32) -> (i32, i32, i32) {
    %c0_i32 = arith.constant 0 : i32
    %c0_i32_0 = arith.constant 0 : i32
    %c0_i32_1 = arith.constant 0 : i32
    return %arg0, %c0_i32, %c0_i32_0 : i32, i32, i32
  }
  func.func @transform_1(%arg0: i32) -> (i32, i32, i32) {
    %c0_i32 = arith.constant 0 : i32
    %c0_i32_0 = arith.constant 0 : i32
    %c0_i32_1 = arith.constant 0 : i32
    return %arg0, %c0_i32, %c0_i32_0 : i32, i32, i32
  }
  func.func @transform_2(%arg0: i32) -> (i32, i32) {
    %c0_i32 = arith.constant 0 : i32
    %c0_i32_0 = arith.constant 0 : i32
    %c0_i32_1 = arith.constant 0 : i32
    return %c0_i32, %c0_i32_0 : i32, i32
  }
  func.func @transform_3(%arg0: i32) -> (i32, i32) {
    %c0_i32 = arith.constant 0 : i32
    %c0_i32_0 = arith.constant 0 : i32
    %c0_i32_1 = arith.constant 0 : i32
    return %c0_i32, %c0_i32_0 : i32, i32
  }
  func.func @transform_4(%arg0: i32) -> (i32, i32, i32) {
    %c0_i32 = arith.constant 0 : i32
    %c0_i32_0 = arith.constant 0 : i32
    %c0_i32_1 = arith.constant 0 : i32
    return %arg0, %c0_i32, %c0_i32_0 : i32, i32, i32
  }
  func.func @transform_5(%arg0: i32) -> (i32, i32, i32) {
    %c0_i32 = arith.constant 0 : i32
    %c0_i32_0 = arith.constant 0 : i32
    %c0_i32_1 = arith.constant 0 : i32
    return %arg0, %c0_i32, %c0_i32_0 : i32, i32, i32
  }
}

</mosaic_0001>

<llo_original>
// kernel: tpu_custom_call.1
$region0: #{tpu_custom_call.1}
  #allocation0 [shape = 'u32[]', space=smem, size = 0x4, offset = 0x4, fixed_abs, tag = 'smem constant byte address 0x4 - core index']
  #allocation1 [shape = 'u32[72,128]{1,0:T(1,128)}', space=vmem, size = 0x9000, scoped, tag = 'internal scratch']
  %s0 = inlined_call_operand.hbm [shape: f32[2,8,32], index: 0, kind: input, shape index: {}]
  %s1 = inlined_call_operand.hbm [shape: f32[2,8,8], index: 1, kind: input, shape index: {}]
  %s2 = inlined_call_operand.hbm [shape: f32[64,256], index: 2, kind: input, shape index: {}]
  %s3 = inlined_call_operand.hbm [shape: f32[8,128], index: 3, kind: input, shape index: {}]
  %s4 = inlined_call_operand.hbm [shape: f32[2,8,32], index: 4, kind: output, shape index: {0}]
  %s5 = inlined_call_operand.hbm [shape: f32[2,8,32], index: 5, kind: output, shape index: {1}]
  %6 = xla_tuple %s4, %s5
  %s7 = sld [smem:[#allocation0]]
  $region50: #{tpu_custom_call.1} parent=0
    _
  %s9 = ssub.s32 1, %s7
  %s10 = scalar_select 0, %s9, %s7
  $region1: #{tpu_custom_call.1} parent=0
    #allocation2 [shape = 'u8[8192]{0}', space=vmem, size = 0x2000, scoped, tag = 'input window, operand 0, single buffered']
    #allocation3 [shape = 's32[1]{0}', space=sflag, size = 0x4, scoped, tag = 'scoped memory for tpu_custom_call.1']
    #allocation4 [shape = 's32[1]{0}', space=sflag, size = 0x4, scoped, tag = 'scoped memory for tpu_custom_call.1']
    #allocation5 [shape = 'u8[8192]{0}', space=vmem, size = 0x2000, scoped, tag = 'input window, operand 1, single buffered']
    #allocation6 [shape = 's32[1]{0}', space=sflag, size = 0x4, scoped, tag = 'scoped memory for tpu_custom_call.1']
    #allocation7 [shape = 'u8[65536]{0}', space=vmem, size = 0x10000, scoped, tag = 'input window, operand 2, single buffered']
    #allocation8 [shape = 'u8[4096]{0}', space=vmem, size = 0x1000, scoped, tag = 'input window, operand 3, single buffered']
    #allocation9 [shape = 's32[1]{0}', space=sflag, size = 0x4, scoped, tag = 'scoped memory for tpu_custom_call.1']
    #allocation10 [shape = 'u8[8192]{0}', space=vmem, size = 0x2000, scoped, tag = 'output window, operand 0, single buffered']
    #allocation11 [shape = 'u8[8192]{0}', space=vmem, size = 0x2000, scoped, tag = 'output window, operand 1, single buffered']
    #allocation12 [shape = 's32[1]{0}', space=sflag, size = 0x4, scoped, tag = 'scoped memory for tpu_custom_call.1']
    %11 = vsyncpa [#allocation3], 0
    %12 = vsyncpa [#allocation6], 0
    %13 = vsyncpa [#allocation9], 0
    %14 = vsyncpa [#allocation4], 0
    %15 = vsyncpa [#allocation12], 0
    // Predicated region
    $region2: #{tpu_custom_call.1} parent=1 // pred_check
      _
    $region3: #{tpu_custom_call.1} parent=1 // pred_check_branch
      %17 = sbr.rel (0) target = $region5
    $region4: #{tpu_custom_call.1} parent=1 // pred_region
      %19 = vsyncadd [#allocation3], 0
      %s20 = sshll.u32 %s0, 4
      %s21 = int_to_ptr.hbm [resolvable:$true] %s20
      %s22 = sshll.u32 [#allocation2], 4
      %s23 = int_to_ptr.vmem [resolvable:$true] %s22
      %28 = dma.hbm_to_vmem [thread:$0]  %s21, 256, %s23, [#allocation3], 128, 128, 8
    $region5: #{tpu_custom_call.1} parent=1 // pred_fallthru
      _
    // Predicated region
    $region6: #{tpu_custom_call.1} parent=1 // pred_check
      _
    $region7: #{tpu_custom_call.1} parent=1 // pred_check_branch
      %30 = sbr.rel (0) target = $region9
    $region8: #{tpu_custom_call.1} parent=1 // pred_region
      %32 = vsyncadd [#allocation6], 0
      %s33 = sshll.u32 %s1, 4
      %s34 = int_to_ptr.hbm [resolvable:$true] %s33
      %s35 = sshll.u32 [#allocation5], 4
      %s36 = int_to_ptr.vmem [resolvable:$true] %s35
      %41 = dma.hbm_to_vmem [thread:$0]  %s34, 256, %s36, [#allocation6], 128, 128, 8
    $region9: #{tpu_custom_call.1} parent=1 // pred_fallthru
      _
    // Predicated region
    $region10: #{tpu_custom_call.1} parent=1 // pred_check
      _
    $region11: #{tpu_custom_call.1} parent=1 // pred_check_branch
      %43 = sbr.rel (0) target = $region13
    $region12: #{tpu_custom_call.1} parent=1 // pred_region
      %45 = vsyncadd [#allocation6], 0
      %s46 = sshll.u32 %s2, 4
      %s47 = int_to_ptr.hbm [resolvable:$true] %s46
      %s48 = sshll.u32 [#allocation7], 4
      %s49 = int_to_ptr.vmem [resolvable:$true] %s48
      %54 = dma.hbm_to_vmem [thread:$0]  %s47, 2048, %s49, [#allocation6], 256, 256, 16
    $region13: #{tpu_custom_call.1} parent=1 // pred_fallthru
      _
    // Predicated region
    $region14: #{tpu_custom_call.1} parent=1 // pred_check
      _
    $region15: #{tpu_custom_call.1} parent=1 // pred_check_branch
      %56 = sbr.rel (0) target = $region17
    $region16: #{tpu_custom_call.1} parent=1 // pred_region
      %58 = vsyncadd [#allocation9], 0
      %s60 = sshll.u32 %s3, 4
      %s61 = int_to_ptr.hbm [resolvable:$true] %s60
      %s62 = sshll.u32 [#allocation8], 4
      %s63 = int_to_ptr.vmem [resolvable:$true] %s62
      %65 = dma.hbm_to_vmem [thread:$0]  %s61, 128, %s63, [#allocation9]
    $region17: #{tpu_custom_call.1} parent=1 // pred_fallthru
      _
    // Predicated region
    $region18: #{tpu_custom_call.1} parent=1 // pred_check
      _
    $region19: #{tpu_custom_call.1} parent=1 // pred_check_branch
      %67 = sbr.rel (0) target = $region21
    $region20: #{tpu_custom_call.1} parent=1 // pred_region
      %69 = dma.done [#allocation3], 256
    $region21: #{tpu_custom_call.1} parent=1 // pred_fallthru
      _
    // Predicated region
    $region22: #{tpu_custom_call.1} parent=1 // pred_check
      _
    $region23: #{tpu_custom_call.1} parent=1 // pred_check_branch
      %71 = sbr.rel (0) target = $region25
    $region24: #{tpu_custom_call.1} parent=1 // pred_region
      %73 = dma.done [#allocation6], 256
    $region25: #{tpu_custom_call.1} parent=1 // pred_fallthru
      _
    // Predicated region
    $region26: #{tpu_custom_call.1} parent=1 // pred_check
      _
    $region27: #{tpu_custom_call.1} parent=1 // pred_check_branch
      %75 = sbr.rel (0) target = $region29
    $region28: #{tpu_custom_call.1} parent=1 // pred_region
      %77 = dma.done [#allocation6], 2048
    $region29: #{tpu_custom_call.1} parent=1 // pred_fallthru
      _
    // Predicated region
    $region30: #{tpu_custom_call.1} parent=1 // pred_check
      _
    $region31: #{tpu_custom_call.1} parent=1 // pred_check_branch
      %79 = sbr.rel (0) target = $region33
    $region32: #{tpu_custom_call.1} parent=1 // pred_region
      %81 = dma.done [#allocation9], 128
    $region33: #{tpu_custom_call.1} parent=1 // pred_fallthru
      _
    %v82 = vld [vmem:[#allocation2] sm:$0xff]
    %v83 = vld [vmem:[#allocation2 + $0x8] sm:$0xff]
    %v84 = vld [vmem:[#allocation5] sm:$0xff]
    %v85 = vld [vmem:[#allocation5 + $0x8] sm:$0xff]
    %v86 = vld [vmem:[#allocation8] sm:$0xff]
    %v87 = vld [vmem:[#allocation7] sm:$0xff]
    %v88 = vld [vmem:[#allocation7 + $0x10] sm:$0xff]
    %v89 = vld [vmem:[#allocation7 + $0x20] sm:$0xff]
    %v90 = vld [vmem:[#allocation7 + $0x30] sm:$0xff]
    %v91 = vld [vmem:[#allocation7 + $0x8] sm:$0xff]
    %v92 = vld [vmem:[#allocation7 + $0x18] sm:$0xff]
    %v93 = vld [vmem:[#allocation7 + $0x28] sm:$0xff]
    %v94 = vld [vmem:[#allocation7 + $0x38] sm:$0xff]
    %v95 = vld [vmem:[#allocation7 + $0x8] sm:$0xff]
    %v96 = vld [vmem:[#allocation7 + $0x18] sm:$0xff]
    %v97 = vld [vmem:[#allocation7 + $0x28] sm:$0xff]
    %v98 = vld [vmem:[#allocation7 + $0x38] sm:$0xff]
    %v99 = vld [vmem:[#allocation7 + $0x48] sm:$0xff]
    %v100 = vld [vmem:[#allocation7 + $0x58] sm:$0xff]
    %v101 = vld [vmem:[#allocation7 + $0x68] sm:$0xff]
    %v102 = vld [vmem:[#allocation7 + $0x78] sm:$0xff]
    %vm103 = vcmask 261120
    %v104 = vsel %vm103, %v82, 0.0
    %105 = vadd.xlane.f32.xlu0 %v104
    %v106 = vpop.xlane.xlu0 %105
    %v107 = vsel %vm103, %v83, 0.0
    %108 = vadd.xlane.f32.xlu0 %v107
    %v109 = vpop.xlane.xlu0 %108
    %v110 = vrcp.pop 32.0
    %v111 = vmul.f32 32.0, %v110
    %v112 = vsub.f32 1.0, %v111
    %v113 = vmul.f32 %v110, %v112
    %v114 = vadd.f32 %v110, %v113
    %vm115 = vweird.f32 %v110
    %v116 = vsel %vm115, %v110, %v114
    %v117 = vmul.f32 %v106, %v116
    %v118 = vmul.f32 %v109, %v116
    %v119 = vsub.f32 %v82, %v117
    %v120 = vsub.f32 %v83, %v118
    %v121 = vmul.f32 %v119, %v119
    %v122 = vmul.f32 %v120, %v120
    %v123 = vsel %vm103, %v121, 0.0
    %124 = vadd.xlane.f32.xlu0 %v123
    %v125 = vpop.xlane.xlu0 %124
    %v126 = vsel %vm103, %v122, 0.0
    %127 = vadd.xlane.f32.xlu0 %v126
    %v128 = vpop.xlane.xlu0 %127
    %v129 = vmul.f32 %v125, %v116
    %v130 = vmul.f32 %v128, %v116
    %v131 = vadd.f32 %v129, 1e-12
    %v132 = vadd.f32 %v130, 1e-12
    %v133 = vrsqrt.pop %v131
    %v134 = vmul.f32 %v133, %v131
    %v135 = vmul.f32 %v134, %v133
    %v136 = vmul.f32 0.5, %v135
    %v137 = vsub.f32 1.5, %v136
    %v138 = vmul.f32 %v133, %v137
    %vm139 = vweird.f32 %v131
    %vm140 = vweird.f32 %v133
    %vm141 = vmor %vm139, %vm140
    %v142 = vsel %vm141, %v133, %v138
    %v143 = vrsqrt.pop %v132
    %v144 = vmul.f32 %v143, %v132
    %v145 = vmul.f32 %v144, %v143
    %v146 = vmul.f32 0.5, %v145
    %v147 = vsub.f32 1.5, %v146
    %v148 = vmul.f32 %v143, %v147
    %vm149 = vweird.f32 %v132
    %vm150 = vweird.f32 %v143
    %vm151 = vmor %vm149, %vm150
    %v152 = vsel %vm151, %v143, %v148
    %v153 = vmul.f32 %v119, %v142
    %v154 = vmul.f32 %v120, %v152
    %v155 = vperm.slane %v86, 0
    %v156 = vmul.f32 %v153, %v155
    %v157 = vmul.f32 %v154, %v155
    %v158 = vperm.slane %v86, 1
    %v159 = vadd.f32 %v156, %v158
    %v160 = vadd.f32 %v157, %v158
    %v161 = vperm.slane %v86, 2
    %v163 = vsel %vm103, %v159, 0
    %v166 = vsel %vm103, %v160, 0
    %168 = vmatpush.msra.mxu0 0.0
    %169 = vmatpush.msra.mxu0 0.0
    %170 = vmatpush.msra.mxu0 0.0
    %171 = vmatpush.msra.mxu0 0.0
    %172 = vmatpush.msra.mxu0 0.0
    %173 = vmatpush.msra.mxu0 0.0
    %174 = vmatpush.msra.mxu0 0.0
    %175 = vmatpush.msra.mxu0 0.0
    %176 = vmatpush.msra.mxu0 0.0
    %177 = vmatpush.msra.mxu0 0.0
    %178 = vmatpush.msra.mxu0 0.0
    %179 = vmatpush.msra.mxu0 0.0
    %180 = vmatpush.msra.mxu0 %v90
    %181 = vmatpush.msra.mxu0 %v89
    %182 = vmatpush.msra.mxu0 %v88
    %183 = vmatpush.msra.mxu0 %v87
    %184 = vmatmul.f32.gmra.mxu0 %v163
    %v185 = vpop.f32.mrf.mxu0
    %v186 = vadd.f32 %v161, %v185
    %187 = vmatmul.f32.gmra.mxu0 %v166
    %v188 = vpop.f32.mrf.mxu0
    %v189 = vadd.f32 %v161, %v188
    %190 = vdwg.mxu0
    %v191 = vmul.f32 %v186, 0.35355338
    %v192 = vmul.f32 %v189, 0.35355338
    %vm193 = vcmp.gt.f32.partialorder %v84, 0.0
    %vm194 = vcmp.gt.f32.partialorder %v85, 0.0
    %196 = vrot.lane.b32.xlu0 %v186, 96
    %v197 = vpop.permute.xlu0 %196
    %vm198 = vcmask 64512
    %v200 = vsel %vm198, %v191, 0
    %v202 = vsel %vm198, %v197, 0
    %204 = vmatpush.xpose.msra.mxu0 0.0
    %205 = vmatpush.xpose.msra.mxu0 0.0
    %206 = vmatpush.xpose.msra.mxu0 0.0
    %207 = vmatpush.xpose.msra.mxu0 0.0
    %208 = vmatpush.xpose.msra.mxu0 0.0
    %209 = vmatpush.xpose.msra.mxu0 0.0
    %210 = vmatpush.xpose.msra.mxu0 0.0
    %211 = vmatpush.xpose.msra.mxu0 0.0
    %212 = vmatpush.xpose.msra.mxu0 0.0
    %213 = vmatpush.xpose.msra.mxu0 0.0
    %214 = vmatpush.xpose.msra.mxu0 0.0
    %215 = vmatpush.xpose.msra.mxu0 0.0
    %216 = vmatpush.xpose.msra.mxu0 0.0
    %217 = vmatpush.xpose.msra.mxu0 0.0
    %218 = vmatpush.xpose.msra.mxu0 0.0
    %219 = vmatpush.xpose.msra.mxu0 %v202
    %220 = vmatmul.f32.gmra.mxu0 %v200
    %v221 = vpop.f32.mrf.mxu0
    %v222 = vadd.f32 0.0, %v221
    %223 = vdwg.mxu0
    %225 = vrot.lane.b32.xlu0 %v189, 96
    %v226 = vpop.permute.xlu0 %225
    %v228 = vsel %vm198, %v192, 0
    %v230 = vsel %vm198, %v226, 0
    %232 = vmatpush.xpose.msra.mxu0 0.0
    %233 = vmatpush.xpose.msra.mxu0 0.0
    %234 = vmatpush.xpose.msra.mxu0 0.0
    %235 = vmatpush.xpose.msra.mxu0 0.0
    %236 = vmatpush.xpose.msra.mxu0 0.0
    %237 = vmatpush.xpose.msra.mxu0 0.0
    %238 = vmatpush.xpose.msra.mxu0 0.0
    %239 = vmatpush.xpose.msra.mxu0 0.0
    %240 = vmatpush.xpose.msra.mxu0 0.0
    %241 = vmatpush.xpose.msra.mxu0 0.0
    %242 = vmatpush.xpose.msra.mxu0 0.0
    %243 = vmatpush.xpose.msra.mxu0 0.0
    %244 = vmatpush.xpose.msra.mxu0 0.0
    %245 = vmatpush.xpose.msra.mxu0 0.0
    %246 = vmatpush.xpose.msra.mxu0 0.0
    %247 = vmatpush.xpose.msra.mxu0 %v230
    %248 = vmatmul.f32.gmra.mxu0 %v228
    %v249 = vpop.f32.mrf.mxu0
    %v250 = vadd.f32 0.0, %v249
    %251 = vdwg.mxu0
    %v252 = vsel %vm193, %v222, -3.4028235e+38
    %v253 = vsel %vm194, %v250, -3.4028235e+38
    %v254 = vsel %vm198, %v252, -inf
    %255 = vmax.xlane.f32.xlu0 %v254
    %v256 = vpop.xlane.xlu0 %255
    %v257 = vsel %vm198, %v253, -inf
    %258 = vmax.xlane.f32.xlu0 %v257
    %v259 = vpop.xlane.xlu0 %258
    %v260 = vsub.f32 %v252, %v256
    %v261 = vsub.f32 %v253, %v259
    %v262 = vmul.f32 %v260, 1.442695
    %v263 = vpow.pop %v262
    %v264 = vmul.f32 %v261, 1.442695
    %v265 = vpow.pop %v264
    %v266 = vsel %vm198, %v263, 0.0
    %267 = vadd.xlane.f32.xlu0 %v266
    %v268 = vpop.xlane.xlu0 %267
    %v269 = vsel %vm198, %v265, 0.0
    %270 = vadd.xlane.f32.xlu0 %v269
    %v271 = vpop.xlane.xlu0 %270
    %v272 = vrcp.pop %v268
    %v273 = vmul.f32 %v268, %v272
    %v274 = vsub.f32 1.0, %v273
    %v275 = vmul.f32 %v272, %v274
    %v276 = vadd.f32 %v272, %v275
    %vm277 = vweird.f32 %v268
    %vm278 = vweird.f32 %v272
    %vm279 = vmor %vm277, %vm278
    %v280 = vsel %vm279, %v272, %v276
    %v281 = vand.u32 2147483647, %v268
    %vm282 = vcmp.eq.f32.partialorder %v281, 8.507059e+37
    %v283 = vand.u32 %v268, 2147483648
    %v284 = vor.u32 1.1754944e-38, %v283
    %v285 = vsel %vm282, %v284, %v280
    %v286 = vmul.f32 %v263, %v285
    %v287 = vrcp.pop %v271
    %v288 = vmul.f32 %v271, %v287
    %v289 = vsub.f32 1.0, %v288
    %v290 = vmul.f32 %v287, %v289
    %v291 = vadd.f32 %v287, %v290
    %vm292 = vweird.f32 %v271
    %vm293 = vweird.f32 %v287
    %vm294 = vmor %vm292, %vm293
    %v295 = vsel %vm294, %v287, %v291
    %v296 = vand.u32 2147483647, %v271
    %vm297 = vcmp.eq.f32.partialorder %v296, 8.507059e+37
    %v298 = vand.u32 %v271, 2147483648
    %v299 = vor.u32 1.1754944e-38, %v298
    %v300 = vsel %vm297, %v299, %v295
    %v301 = vmul.f32 %v265, %v300
    %302 = vrot.lane.b32.xlu0 %v186, 64
    %v303 = vpop.permute.xlu0 %302
    %v306 = vsel %vm198, %v286, 0
    %308 = vmatpush.msra.mxu0 0.0
    %309 = vmatpush.msra.mxu0 0.0
    %310 = vmatpush.msra.mxu0 0.0
    %311 = vmatpush.msra.mxu0 0.0
    %312 = vmatpush.msra.mxu0 0.0
    %313 = vmatpush.msra.mxu0 0.0
    %314 = vmatpush.msra.mxu0 0.0
    %315 = vmatpush.msra.mxu0 0.0
    %316 = vmatpush.msra.mxu0 0.0
    %317 = vmatpush.msra.mxu0 0.0
    %318 = vmatpush.msra.mxu0 0.0
    %319 = vmatpush.msra.mxu0 0.0
    %320 = vmatpush.msra.mxu0 0.0
    %321 = vmatpush.msra.mxu0 0.0
    %322 = vmatpush.msra.mxu0 0.0
    %323 = vmatpush.msra.mxu0 %v303
    %324 = vmatmul.f32.gmra.mxu0 %v306
    %v325 = vpop.f32.mrf.mxu0
    %v326 = vadd.f32 0.0, %v325
    %327 = vdwg.mxu0
    %328 = vrot.lane.b32.xlu0 %v189, 64
    %v329 = vpop.permute.xlu0 %328
    %v332 = vsel %vm198, %v301, 0
    %334 = vmatpush.msra.mxu0 0.0
    %335 = vmatpush.msra.mxu0 0.0
    %336 = vmatpush.msra.mxu0 0.0
    %337 = vmatpush.msra.mxu0 0.0
    %338 = vmatpush.msra.mxu0 0.0
    %339 = vmatpush.msra.mxu0 0.0
    %340 = vmatpush.msra.mxu0 0.0
    %341 = vmatpush.msra.mxu0 0.0
    %342 = vmatpush.msra.mxu0 0.0
    %343 = vmatpush.msra.mxu0 0.0
    %344 = vmatpush.msra.mxu0 0.0
    %345 = vmatpush.msra.mxu0 0.0
    %346 = vmatpush.msra.mxu0 0.0
    %347 = vmatpush.msra.mxu0 0.0
    %348 = vmatpush.msra.mxu0 0.0
    %349 = vmatpush.msra.mxu0 %v329
    %350 = vmatmul.f32.gmra.mxu0 %v332
    %v351 = vpop.f32.mrf.mxu0
    %v352 = vadd.f32 0.0, %v351
    %353 = vdwg.mxu0
    %354 = vrot.lane.b32.xlu0 %v191, 120
    %v355 = vpop.permute.xlu0 %354
    %356 = vrot.lane.b32.xlu0 %v186, 88
    %v357 = vpop.permute.xlu0 %356
    %v358 = vsel %vm198, %v355, 0
    %v360 = vsel %vm198, %v357, 0
    %362 = vmatpush.xpose.msra.mxu0 0.0
    %363 = vmatpush.xpose.msra.mxu0 0.0
    %364 = vmatpush.xpose.msra.mxu0 0.0
    %365 = vmatpush.xpose.msra.mxu0 0.0
    %366 = vmatpush.xpose.msra.mxu0 0.0
    %367 = vmatpush.xpose.msra.mxu0 0.0
    %368 = vmatpush.xpose.msra.mxu0 0.0
    %369 = vmatpush.xpose.msra.mxu0 0.0
    %370 = vmatpush.xpose.msra.mxu0 0.0
    %371 = vmatpush.xpose.msra.mxu0 0.0
    %372 = vmatpush.xpose.msra.mxu0 0.0
    %373 = vmatpush.xpose.msra.mxu0 0.0
    %374 = vmatpush.xpose.msra.mxu0 0.0
    %375 = vmatpush.xpose.msra.mxu0 0.0
    %376 = vmatpush.xpose.msra.mxu0 0.0
    %377 = vmatpush.xpose.msra.mxu0 %v360
    %378 = vmatmul.f32.gmra.mxu0 %v358
    %v379 = vpop.f32.mrf.mxu0
    %v380 = vadd.f32 0.0, %v379
    %381 = vdwg.mxu0
    %382 = vrot.lane.b32.xlu0 %v192, 120
    %v383 = vpop.permute.xlu0 %382
    %384 = vrot.lane.b32.xlu0 %v189, 88
    %v385 = vpop.permute.xlu0 %384
    %v386 = vsel %vm198, %v383, 0
    %v388 = vsel %vm198, %v385, 0
    %390 = vmatpush.xpose.msra.mxu0 0.0
    %391 = vmatpush.xpose.msra.mxu0 0.0
    %392 = vmatpush.xpose.msra.mxu0 0.0
    %393 = vmatpush.xpose.msra.mxu0 0.0
    %394 = vmatpush.xpose.msra.mxu0 0.0
    %395 = vmatpush.xpose.msra.mxu0 0.0
    %396 = vmatpush.xpose.msra.mxu0 0.0
    %397 = vmatpush.xpose.msra.mxu0 0.0
    %398 = vmatpush.xpose.msra.mxu0 0.0
    %399 = vmatpush.xpose.msra.mxu0 0.0
    %400 = vmatpush.xpose.msra.mxu0 0.0
    %401 = vmatpush.xpose.msra.mxu0 0.0
    %402 = vmatpush.xpose.msra.mxu0 0.0
    %403 = vmatpush.xpose.msra.mxu0 0.0
    %404 = vmatpush.xpose.msra.mxu0 0.0
    %405 = vmatpush.xpose.msra.mxu0 %v388
    %406 = vmatmul.f32.gmra.mxu0 %v386
    %v407 = vpop.f32.mrf.mxu0
    %v408 = vadd.f32 0.0, %v407
    %409 = vdwg.mxu0
    %v410 = vsel %vm193, %v380, -3.4028235e+38
    %v411 = vsel %vm194, %v408, -3.4028235e+38
    %v412 = vsel %vm198, %v410, -inf
    %413 = vmax.xlane.f32.xlu0 %v412
    %v414 = vpop.xlane.xlu0 %413
    %v415 = vsel %vm198, %v411, -inf
    %416 = vmax.xlane.f32.xlu0 %v415
    %v417 = vpop.xlane.xlu0 %416
    %v418 = vsub.f32 %v410, %v414
    %v419 = vsub.f32 %v411, %v417
    %v420 = vmul.f32 %v418, 1.442695
    %v421 = vpow.pop %v420
    %v422 = vmul.f32 %v419, 1.442695
    %v423 = vpow.pop %v422
    %v424 = vsel %vm198, %v421, 0.0
    %425 = vadd.xlane.f32.xlu0 %v424
    %v426 = vpop.xlane.xlu0 %425
    %v427 = vsel %vm198, %v423, 0.0
    %428 = vadd.xlane.f32.xlu0 %v427
    %v429 = vpop.xlane.xlu0 %428
    %v430 = vrcp.pop %v426
    %v431 = vmul.f32 %v426, %v430
    %v432 = vsub.f32 1.0, %v431
    %v433 = vmul.f32 %v430, %v432
    %v434 = vadd.f32 %v430, %v433
    %vm435 = vweird.f32 %v426
    %vm436 = vweird.f32 %v430
    %vm437 = vmor %vm435, %vm436
    %v438 = vsel %vm437, %v430, %v434
    %v439 = vand.u32 2147483647, %v426
    %vm440 = vcmp.eq.f32.partialorder %v439, 8.507059e+37
    %v441 = vand.u32 %v426, 2147483648
    %v442 = vor.u32 1.1754944e-38, %v441
    %v443 = vsel %vm440, %v442, %v438
    %v444 = vmul.f32 %v421, %v443
    %v445 = vrcp.pop %v429
    %v446 = vmul.f32 %v429, %v445
    %v447 = vsub.f32 1.0, %v446
    %v448 = vmul.f32 %v445, %v447
    %v449 = vadd.f32 %v445, %v448
    %vm450 = vweird.f32 %v429
    %vm451 = vweird.f32 %v445
    %vm452 = vmor %vm450, %vm451
    %v453 = vsel %vm452, %v445, %v449
    %v454 = vand.u32 2147483647, %v429
    %vm455 = vcmp.eq.f32.partialorder %v454, 8.507059e+37
    %v456 = vand.u32 %v429, 2147483648
    %v457 = vor.u32 1.1754944e-38, %v456
    %v458 = vsel %vm455, %v457, %v453
    %v459 = vmul.f32 %v423, %v458
    %460 = vrot.lane.b32.xlu0 %v186, 56
    %v461 = vpop.permute.xlu0 %460
    %v464 = vsel %vm198, %v444, 0
    %466 = vmatpush.msra.mxu0 0.0
    %467 = vmatpush.msra.mxu0 0.0
    %468 = vmatpush.msra.mxu0 0.0
    %469 = vmatpush.msra.mxu0 0.0
    %470 = vmatpush.msra.mxu0 0.0
    %471 = vmatpush.msra.mxu0 0.0
    %472 = vmatpush.msra.mxu0 0.0
    %473 = vmatpush.msra.mxu0 0.0
    %474 = vmatpush.msra.mxu0 0.0
    %475 = vmatpush.msra.mxu0 0.0
    %476 = vmatpush.msra.mxu0 0.0
    %477 = vmatpush.msra.mxu0 0.0
    %478 = vmatpush.msra.mxu0 0.0
    %479 = vmatpush.msra.mxu0 0.0
    %480 = vmatpush.msra.mxu0 0.0
    %481 = vmatpush.msra.mxu0 %v461
    %482 = vmatmul.f32.gmra.mxu0 %v464
    %v483 = vpop.f32.mrf.mxu0
    %v484 = vadd.f32 0.0, %v483
    %485 = vdwg.mxu0
    %486 = vrot.lane.b32.xlu0 %v189, 56
    %v487 = vpop.permute.xlu0 %486
    %v490 = vsel %vm198, %v459, 0
    %492 = vmatpush.msra.mxu0 0.0
    %493 = vmatpush.msra.mxu0 0.0
    %494 = vmatpush.msra.mxu0 0.0
    %495 = vmatpush.msra.mxu0 0.0
    %496 = vmatpush.msra.mxu0 0.0
    %497 = vmatpush.msra.mxu0 0.0
    %498 = vmatpush.msra.mxu0 0.0
    %499 = vmatpush.msra.mxu0 0.0
    %500 = vmatpush.msra.mxu0 0.0
    %501 = vmatpush.msra.mxu0 0.0
    %502 = vmatpush.msra.mxu0 0.0
    %503 = vmatpush.msra.mxu0 0.0
    %504 = vmatpush.msra.mxu0 0.0
    %505 = vmatpush.msra.mxu0 0.0
    %506 = vmatpush.msra.mxu0 0.0
    %507 = vmatpush.msra.mxu0 %v487
    %508 = vmatmul.f32.gmra.mxu0 %v490
    %v509 = vpop.f32.mrf.mxu0
    %v510 = vadd.f32 0.0, %v509
    %511 = vdwg.mxu0
    %512 = vrot.lane.b32.xlu0 %v191, 112
    %v513 = vpop.permute.xlu0 %512
    %514 = vrot.lane.b32.xlu0 %v186, 80
    %v515 = vpop.permute.xlu0 %514
    %v516 = vsel %vm198, %v513, 0
    %v518 = vsel %vm198, %v515, 0
    %520 = vmatpush.xpose.msra.mxu0 0.0
    %521 = vmatpush.xpose.msra.mxu0 0.0
    %522 = vmatpush.xpose.msra.mxu0 0.0
    %523 = vmatpush.xpose.msra.mxu0 0.0
    %524 = vmatpush.xpose.msra.mxu0 0.0
    %525 = vmatpush.xpose.msra.mxu0 0.0
    %526 = vmatpush.xpose.msra.mxu0 0.0
    %527 = vmatpush.xpose.msra.mxu0 0.0
    %528 = vmatpush.xpose.msra.mxu0 0.0
    %529 = vmatpush.xpose.msra.mxu0 0.0
    %530 = vmatpush.xpose.msra.mxu0 0.0
    %531 = vmatpush.xpose.msra.mxu0 0.0
    %532 = vmatpush.xpose.msra.mxu0 0.0
    %533 = vmatpush.xpose.msra.mxu0 0.0
    %534 = vmatpush.xpose.msra.mxu0 0.0
    %535 = vmatpush.xpose.msra.mxu0 %v518
    %536 = vmatmul.f32.gmra.mxu0 %v516
    %v537 = vpop.f32.mrf.mxu0
    %v538 = vadd.f32 0.0, %v537
    %539 = vdwg.mxu0
    %540 = vrot.lane.b32.xlu0 %v192, 112
    %v541 = vpop.permute.xlu0 %540
    %542 = vrot.lane.b32.xlu0 %v189, 80
    %v543 = vpop.permute.xlu0 %542
    %v544 = vsel %vm198, %v541, 0
    %v546 = vsel %vm198, %v543, 0
    %548 = vmatpush.xpose.msra.mxu0 0.0
    %549 = vmatpush.xpose.msra.mxu0 0.0
    %550 = vmatpush.xpose.msra.mxu0 0.0
    %551 = vmatpush.xpose.msra.mxu0 0.0
    %552 = vmatpush.xpose.msra.mxu0 0.0
    %553 = vmatpush.xpose.msra.mxu0 0.0
    %554 = vmatpush.xpose.msra.mxu0 0.0
    %555 = vmatpush.xpose.msra.mxu0 0.0
    %556 = vmatpush.xpose.msra.mxu0 0.0
    %557 = vmatpush.xpose.msra.mxu0 0.0
    %558 = vmatpush.xpose.msra.mxu0 0.0
    %559 = vmatpush.xpose.msra.mxu0 0.0
    %560 = vmatpush.xpose.msra.mxu0 0.0
    %561 = vmatpush.xpose.msra.mxu0 0.0
    %562 = vmatpush.xpose.msra.mxu0 0.0
    %563 = vmatpush.xpose.msra.mxu0 %v546
    %564 = vmatmul.f32.gmra.mxu0 %v544
    %v565 = vpop.f32.mrf.mxu0
    %v566 = vadd.f32 0.0, %v565
    %567 = vdwg.mxu0
    %v568 = vsel %vm193, %v538, -3.4028235e+38
    %v569 = vsel %vm194, %v566, -3.4028235e+38
    %v570 = vsel %vm198, %v568, -inf
    %571 = vmax.xlane.f32.xlu0 %v570
    %v572 = vpop.xlane.xlu0 %571
    %v573 = vsel %vm198, %v569, -inf
    %574 = vmax.xlane.f32.xlu0 %v573
    %v575 = vpop.xlane.xlu0 %574
    %v576 = vsub.f32 %v568, %v572
    %v577 = vsub.f32 %v569, %v575
    %v578 = vmul.f32 %v576, 1.442695
    %v579 = vpow.pop %v578
    %v580 = vmul.f32 %v577, 1.442695
    %v581 = vpow.pop %v580
    %v582 = vsel %vm198, %v579, 0.0
    %583 = vadd.xlane.f32.xlu0 %v582
    %v584 = vpop.xlane.xlu0 %583
    %v585 = vsel %vm198, %v581, 0.0
    %586 = vadd.xlane.f32.xlu0 %v585
    %v587 = vpop.xlane.xlu0 %586
    %v588 = vrcp.pop %v584
    %v589 = vmul.f32 %v584, %v588
    %v590 = vsub.f32 1.0, %v589
    %v591 = vmul.f32 %v588, %v590
    %v592 = vadd.f32 %v588, %v591
    %vm593 = vweird.f32 %v584
    %vm594 = vweird.f32 %v588
    %vm595 = vmor %vm593, %vm594
    %v596 = vsel %vm595, %v588, %v592
    %v597 = vand.u32 2147483647, %v584
    %vm598 = vcmp.eq.f32.partialorder %v597, 8.507059e+37
    %v599 = vand.u32 %v584, 2147483648
    %v600 = vor.u32 1.1754944e-38, %v599
    %v601 = vsel %vm598, %v600, %v596
    %v602 = vmul.f32 %v579, %v601
    %v603 = vrcp.pop %v587
    %v604 = vmul.f32 %v587, %v603
    %v605 = vsub.f32 1.0, %v604
    %v606 = vmul.f32 %v603, %v605
    %v607 = vadd.f32 %v603, %v606
    %vm608 = vweird.f32 %v587
    %vm609 = vweird.f32 %v603
    %vm610 = vmor %vm608, %vm609
    %v611 = vsel %vm610, %v603, %v607
    %v612 = vand.u32 2147483647, %v587
    %vm613 = vcmp.eq.f32.partialorder %v612, 8.507059e+37
    %v614 = vand.u32 %v587, 2147483648
    %v615 = vor.u32 1.1754944e-38, %v614
    %v616 = vsel %vm613, %v615, %v611
    %v617 = vmul.f32 %v581, %v616
    %618 = vrot.lane.b32.xlu0 %v186, 48
    %v619 = vpop.permute.xlu0 %618
    %v622 = vsel %vm198, %v602, 0
    %624 = vmatpush.msra.mxu0 0.0
    %625 = vmatpush.msra.mxu0 0.0
    %626 = vmatpush.msra.mxu0 0.0
    %627 = vmatpush.msra.mxu0 0.0
    %628 = vmatpush.msra.mxu0 0.0
    %629 = vmatpush.msra.mxu0 0.0
    %630 = vmatpush.msra.mxu0 0.0
    %631 = vmatpush.msra.mxu0 0.0
    %632 = vmatpush.msra.mxu0 0.0
    %633 = vmatpush.msra.mxu0 0.0
    %634 = vmatpush.msra.mxu0 0.0
    %635 = vmatpush.msra.mxu0 0.0
    %636 = vmatpush.msra.mxu0 0.0
    %637 = vmatpush.msra.mxu0 0.0
    %638 = vmatpush.msra.mxu0 0.0
    %639 = vmatpush.msra.mxu0 %v619
    %640 = vmatmul.f32.gmra.mxu0 %v622
    %v641 = vpop.f32.mrf.mxu0
    %v642 = vadd.f32 0.0, %v641
    %643 = vdwg.mxu0
    %644 = vrot.lane.b32.xlu0 %v189, 48
    %v645 = vpop.permute.xlu0 %644
    %v648 = vsel %vm198, %v617, 0
    %650 = vmatpush.msra.mxu0 0.0
    %651 = vmatpush.msra.mxu0 0.0
    %652 = vmatpush.msra.mxu0 0.0
    %653 = vmatpush.msra.mxu0 0.0
    %654 = vmatpush.msra.mxu0 0.0
    %655 = vmatpush.msra.mxu0 0.0
    %656 = vmatpush.msra.mxu0 0.0
    %657 = vmatpush.msra.mxu0 0.0
    %658 = vmatpush.msra.mxu0 0.0
    %659 = vmatpush.msra.mxu0 0.0
    %660 = vmatpush.msra.mxu0 0.0
    %661 = vmatpush.msra.mxu0 0.0
    %662 = vmatpush.msra.mxu0 0.0
    %663 = vmatpush.msra.mxu0 0.0
    %664 = vmatpush.msra.mxu0 0.0
    %665 = vmatpush.msra.mxu0 %v645
    %666 = vmatmul.f32.gmra.mxu0 %v648
    %v667 = vpop.f32.mrf.mxu0
    %v668 = vadd.f32 0.0, %v667
    %669 = vdwg.mxu0
    %670 = vrot.lane.b32.xlu0 %v191, 104
    %v671 = vpop.permute.xlu0 %670
    %672 = vrot.lane.b32.xlu0 %v186, 72
    %v673 = vpop.permute.xlu0 %672
    %v674 = vsel %vm198, %v671, 0
    %v676 = vsel %vm198, %v673, 0
    %678 = vmatpush.xpose.msra.mxu0 0.0
    %679 = vmatpush.xpose.msra.mxu0 0.0
    %680 = vmatpush.xpose.msra.mxu0 0.0
    %681 = vmatpush.xpose.msra.mxu0 0.0
    %682 = vmatpush.xpose.msra.mxu0 0.0
    %683 = vmatpush.xpose.msra.mxu0 0.0
    %684 = vmatpush.xpose.msra.mxu0 0.0
    %685 = vmatpush.xpose.msra.mxu0 0.0
    %686 = vmatpush.xpose.msra.mxu0 0.0
    %687 = vmatpush.xpose.msra.mxu0 0.0
    %688 = vmatpush.xpose.msra.mxu0 0.0
    %689 = vmatpush.xpose.msra.mxu0 0.0
    %690 = vmatpush.xpose.msra.mxu0 0.0
    %691 = vmatpush.xpose.msra.mxu0 0.0
    %692 = vmatpush.xpose.msra.mxu0 0.0
    %693 = vmatpush.xpose.msra.mxu0 %v676
    %694 = vmatmul.f32.gmra.mxu0 %v674
    %v695 = vpop.f32.mrf.mxu0
    %v696 = vadd.f32 0.0, %v695
    %697 = vdwg.mxu0
    %698 = vrot.lane.b32.xlu0 %v192, 104
    %v699 = vpop.permute.xlu0 %698
    %700 = vrot.lane.b32.xlu0 %v189, 72
    %v701 = vpop.permute.xlu0 %700
    %v702 = vsel %vm198, %v699, 0
    %v704 = vsel %vm198, %v701, 0
    %706 = vmatpush.xpose.msra.mxu0 0.0
    %707 = vmatpush.xpose.msra.mxu0 0.0
    %708 = vmatpush.xpose.msra.mxu0 0.0
    %709 = vmatpush.xpose.msra.mxu0 0.0
    %710 = vmatpush.xpose.msra.mxu0 0.0
    %711 = vmatpush.xpose.msra.mxu0 0.0
    %712 = vmatpush.xpose.msra.mxu0 0.0
    %713 = vmatpush.xpose.msra.mxu0 0.0
    %714 = vmatpush.xpose.msra.mxu0 0.0
    %715 = vmatpush.xpose.msra.mxu0 0.0
    %716 = vmatpush.xpose.msra.mxu0 0.0
    %717 = vmatpush.xpose.msra.mxu0 0.0
    %718 = vmatpush.xpose.msra.mxu0 0.0
    %719 = vmatpush.xpose.msra.mxu0 0.0
    %720 = vmatpush.xpose.msra.mxu0 0.0
    %721 = vmatpush.xpose.msra.mxu0 %v704
    %722 = vmatmul.f32.gmra.mxu0 %v702
    %v723 = vpop.f32.mrf.mxu0
    %v724 = vadd.f32 0.0, %v723
    %725 = vdwg.mxu0
    %v726 = vsel %vm193, %v696, -3.4028235e+38
    %v727 = vsel %vm194, %v724, -3.4028235e+38
    %v728 = vsel %vm198, %v726, -inf
    %729 = vmax.xlane.f32.xlu0 %v728
    %v730 = vpop.xlane.xlu0 %729
    %v731 = vsel %vm198, %v727, -inf
    %732 = vmax.xlane.f32.xlu0 %v731
    %v733 = vpop.xlane.xlu0 %732
    %v734 = vsub.f32 %v726, %v730
    %v735 = vsub.f32 %v727, %v733
    %v736 = vmul.f32 %v734, 1.442695
    %v737 = vpow.pop %v736
    %v738 = vmul.f32 %v735, 1.442695
    %v739 = vpow.pop %v738
    %v740 = vsel %vm198, %v737, 0.0
    %741 = vadd.xlane.f32.xlu0 %v740
    %v742 = vpop.xlane.xlu0 %741
    %v743 = vsel %vm198, %v739, 0.0
    %744 = vadd.xlane.f32.xlu0 %v743
    %v745 = vpop.xlane.xlu0 %744
    %v746 = vrcp.pop %v742
    %v747 = vmul.f32 %v742, %v746
    %v748 = vsub.f32 1.0, %v747
    %v749 = vmul.f32 %v746, %v748
    %v750 = vadd.f32 %v746, %v749
    %vm751 = vweird.f32 %v742
    %vm752 = vweird.f32 %v746
    %vm753 = vmor %vm751, %vm752
    %v754 = vsel %vm753, %v746, %v750
    %v755 = vand.u32 2147483647, %v742
    %vm756 = vcmp.eq.f32.partialorder %v755, 8.507059e+37
    %v757 = vand.u32 %v742, 2147483648
    %v758 = vor.u32 1.1754944e-38, %v757
    %v759 = vsel %vm756, %v758, %v754
    %v760 = vmul.f32 %v737, %v759
    %v761 = vrcp.pop %v745
    %v762 = vmul.f32 %v745, %v761
    %v763 = vsub.f32 1.0, %v762
    %v764 = vmul.f32 %v761, %v763
    %v765 = vadd.f32 %v761, %v764
    %vm766 = vweird.f32 %v745
    %vm767 = vweird.f32 %v761
    %vm768 = vmor %vm766, %vm767
    %v769 = vsel %vm768, %v761, %v765
    %v770 = vand.u32 2147483647, %v745
    %vm771 = vcmp.eq.f32.partialorder %v770, 8.507059e+37
    %v772 = vand.u32 %v745, 2147483648
    %v773 = vor.u32 1.1754944e-38, %v772
    %v774 = vsel %vm771, %v773, %v769
    %v775 = vmul.f32 %v739, %v774
    %776 = vrot.lane.b32.xlu0 %v186, 40
    %v777 = vpop.permute.xlu0 %776
    %v780 = vsel %vm198, %v760, 0
    %782 = vmatpush.msra.mxu0 0.0
    %783 = vmatpush.msra.mxu0 0.0
    %784 = vmatpush.msra.mxu0 0.0
    %785 = vmatpush.msra.mxu0 0.0
    %786 = vmatpush.msra.mxu0 0.0
    %787 = vmatpush.msra.mxu0 0.0
    %788 = vmatpush.msra.mxu0 0.0
    %789 = vmatpush.msra.mxu0 0.0
    %790 = vmatpush.msra.mxu0 0.0
    %791 = vmatpush.msra.mxu0 0.0
    %792 = vmatpush.msra.mxu0 0.0
    %793 = vmatpush.msra.mxu0 0.0
    %794 = vmatpush.msra.mxu0 0.0
    %795 = vmatpush.msra.mxu0 0.0
    %796 = vmatpush.msra.mxu0 0.0
    %797 = vmatpush.msra.mxu0 %v777
    %798 = vmatmul.f32.gmra.mxu0 %v780
    %v799 = vpop.f32.mrf.mxu0
    %v800 = vadd.f32 0.0, %v799
    %801 = vdwg.mxu0
    %802 = vrot.lane.b32.xlu0 %v189, 40
    %v803 = vpop.permute.xlu0 %802
    %v806 = vsel %vm198, %v775, 0
    %808 = vmatpush.msra.mxu0 0.0
    %809 = vmatpush.msra.mxu0 0.0
    %810 = vmatpush.msra.mxu0 0.0
    %811 = vmatpush.msra.mxu0 0.0
    %812 = vmatpush.msra.mxu0 0.0
    %813 = vmatpush.msra.mxu0 0.0
    %814 = vmatpush.msra.mxu0 0.0
    %815 = vmatpush.msra.mxu0 0.0
    %816 = vmatpush.msra.mxu0 0.0
    %817 = vmatpush.msra.mxu0 0.0
    %818 = vmatpush.msra.mxu0 0.0
    %819 = vmatpush.msra.mxu0 0.0
    %820 = vmatpush.msra.mxu0 0.0
    %821 = vmatpush.msra.mxu0 0.0
    %822 = vmatpush.msra.mxu0 0.0
    %823 = vmatpush.msra.mxu0 %v803
    %824 = vmatmul.f32.gmra.mxu0 %v806
    %v825 = vpop.f32.mrf.mxu0
    %v826 = vadd.f32 0.0, %v825
    %827 = vdwg.mxu0
    %828 = vrot.lane.b32.xlu0 %v444, 8
    %v829 = vpop.permute.xlu0 %828
    %830 = vrot.lane.b32.xlu0 %v459, 8
    %v831 = vpop.permute.xlu0 %830
    %834 = vrot.lane.b32.xlu0 %v602, 16
    %v835 = vpop.permute.xlu0 %834
    %836 = vrot.lane.b32.xlu0 %v617, 16
    %v837 = vpop.permute.xlu0 %836
    %840 = vrot.lane.b32.xlu0 %v760, 24
    %v841 = vpop.permute.xlu0 %840
    %842 = vrot.lane.b32.xlu0 %v775, 24
    %v843 = vpop.permute.xlu0 %842
    %v846 = vsel %vm198, %v286, %v829
    %v847 = vsel %vm198, %v301, %v831
    %vm848 = vcmask 130048
    %v849 = vsel %vm848, %v846, %v835
    %v850 = vsel %vm848, %v847, %v837
    %vm851 = vcmask 195584
    %v852 = vsel %vm851, %v849, %v841
    %v853 = vsel %vm851, %v850, %v843
    %854 = vst.msk [vmem:[#allocation11] sm:$0xff] %vm103, %v852
    %855 = vst.msk [vmem:[#allocation11 + $0x8] sm:$0xff] %vm103, %v853
    %858 = vrot.lane.b32.xlu0 %v484, 8
    %v859 = vpop.permute.xlu0 %858
    %860 = vrot.lane.b32.xlu0 %v510, 8
    %v861 = vpop.permute.xlu0 %860
    %866 = vrot.lane.b32.xlu0 %v642, 16
    %v867 = vpop.permute.xlu0 %866
    %868 = vrot.lane.b32.xlu0 %v668, 16
    %v869 = vpop.permute.xlu0 %868
    %874 = vrot.lane.b32.xlu0 %v800, 24
    %v875 = vpop.permute.xlu0 %874
    %876 = vrot.lane.b32.xlu0 %v826, 24
    %v877 = vpop.permute.xlu0 %876
    %v880 = vsel %vm198, %v326, %v859
    %v881 = vsel %vm198, %v352, %v861
    %v882 = vsel %vm848, %v880, %v867
    %v883 = vsel %vm848, %v881, %v869
    %v884 = vsel %vm851, %v882, %v875
    %v885 = vsel %vm851, %v883, %v877
    %v886 = vperm.slane %v86, 3
    %891 = vrot.lane.b32.xlu0 %v87, 32
    %v892 = vpop.permute.xlu0 %891
    %893 = vrot.lane.b32.xlu0 %v88, 32
    %v894 = vpop.permute.xlu0 %893
    %895 = vrot.lane.b32.xlu0 %v89, 32
    %v896 = vpop.permute.xlu0 %895
    %897 = vrot.lane.b32.xlu0 %v90, 32
    %v898 = vpop.permute.xlu0 %897
    %v904 = vsel %vm103, %v884, 0
    %v907 = vsel %vm103, %v885, 0
    %909 = vmatpush.msra.mxu0 0.0
    %910 = vmatpush.msra.mxu0 0.0
    %911 = vmatpush.msra.mxu0 0.0
    %912 = vmatpush.msra.mxu0 0.0
    %913 = vmatpush.msra.mxu0 0.0
    %914 = vmatpush.msra.mxu0 0.0
    %915 = vmatpush.msra.mxu0 0.0
    %916 = vmatpush.msra.mxu0 0.0
    %917 = vmatpush.msra.mxu0 0.0
    %918 = vmatpush.msra.mxu0 0.0
    %919 = vmatpush.msra.mxu0 0.0
    %920 = vmatpush.msra.mxu0 0.0
    %921 = vmatpush.msra.mxu0 %v898
    %922 = vmatpush.msra.mxu0 %v896
    %923 = vmatpush.msra.mxu0 %v894
    %924 = vmatpush.msra.mxu0 %v892
    %925 = vmatmul.f32.gmra.mxu0 %v904
    %v926 = vpop.f32.mrf.mxu0
    %v927 = vadd.f32 %v886, %v926
    %928 = vmatmul.f32.gmra.mxu0 %v907
    %v929 = vpop.f32.mrf.mxu0
    %v930 = vadd.f32 %v886, %v929
    %931 = vdwg.mxu0
    %v932 = vadd.f32 %v927, %v82
    %v933 = vadd.f32 %v930, %v83
    %v934 = vsel %vm103, %v932, 0.0
    %935 = vadd.xlane.f32.xlu0 %v934
    %v936 = vpop.xlane.xlu0 %935
    %v937 = vsel %vm103, %v933, 0.0
    %938 = vadd.xlane.f32.xlu0 %v937
    %v939 = vpop.xlane.xlu0 %938
    %v940 = vmul.f32 %v936, %v116
    %v941 = vmul.f32 %v939, %v116
    %v942 = vsub.f32 %v932, %v940
    %v943 = vsub.f32 %v933, %v941
    %v944 = vmul.f32 %v942, %v942
    %v945 = vmul.f32 %v943, %v943
    %v946 = vsel %vm103, %v944, 0.0
    %947 = vadd.xlane.f32.xlu0 %v946
    %v948 = vpop.xlane.xlu0 %947
    %v949 = vsel %vm103, %v945, 0.0
    %950 = vadd.xlane.f32.xlu0 %v949
    %v951 = vpop.xlane.xlu0 %950
    %v952 = vmul.f32 %v948, %v116
    %v953 = vmul.f32 %v951, %v116
    %v954 = vadd.f32 %v952, 1e-12
    %v955 = vadd.f32 %v953, 1e-12
    %v956 = vrsqrt.pop %v954
    %v957 = vmul.f32 %v956, %v954
    %v958 = vmul.f32 %v957, %v956
    %v959 = vmul.f32 0.5, %v958
    %v960 = vsub.f32 1.5, %v959
    %v961 = vmul.f32 %v956, %v960
    %vm962 = vweird.f32 %v954
    %vm963 = vweird.f32 %v956
    %vm964 = vmor %vm962, %vm963
    %v965 = vsel %vm964, %v956, %v961
    %v966 = vrsqrt.pop %v955
    %v967 = vmul.f32 %v966, %v955
    %v968 = vmul.f32 %v967, %v966
    %v969 = vmul.f32 0.5, %v968
    %v970 = vsub.f32 1.5, %v969
    %v971 = vmul.f32 %v966, %v970
    %vm972 = vweird.f32 %v955
    %vm973 = vweird.f32 %v966
    %vm974 = vmor %vm972, %vm973
    %v975 = vsel %vm974, %v966, %v971
    %v976 = vmul.f32 %v942, %v965
    %v977 = vmul.f32 %v943, %v975
    %v978 = vperm.slane %v86, 4
    %v979 = vmul.f32 %v976, %v978
    %v980 = vmul.f32 %v977, %v978
    %v981 = vperm.slane %v86, 5
    %v982 = vadd.f32 %v979, %v981
    %v983 = vadd.f32 %v980, %v981
    %v984 = vperm.slane %v86, 6
    %v986 = vsel %vm103, %v982, 0
    %v989 = vsel %vm103, %v983, 0
    %991 = vmatpush.msra.mxu0 0.0
    %992 = vmatpush.msra.mxu0 0.0
    %993 = vmatpush.msra.mxu0 0.0
    %994 = vmatpush.msra.mxu0 0.0
    %995 = vmatpush.msra.mxu0 0.0
    %996 = vmatpush.msra.mxu0 0.0
    %997 = vmatpush.msra.mxu0 0.0
    %998 = vmatpush.msra.mxu0 0.0
    %999 = vmatpush.msra.mxu0 0.0
    %1000 = vmatpush.msra.mxu0 0.0
    %1001 = vmatpush.msra.mxu0 0.0
    %1002 = vmatpush.msra.mxu0 0.0
    %1003 = vmatpush.msra.mxu0 %v94
    %1004 = vmatpush.msra.mxu0 %v93
    %1005 = vmatpush.msra.mxu0 %v92
    %1006 = vmatpush.msra.mxu0 %v91
    %1007 = vmatmul.f32.gmra.mxu0 %v986
    %v1008 = vpop.f32.mrf.mxu0
    %v1009 = vadd.f32 %v984, %v1008
    %1010 = vmatmul.f32.gmra.mxu0 %v989
    %v1011 = vpop.f32.mrf.mxu0
    %v1012 = vadd.f32 %v984, %v1011
    %1013 = vdwg.mxu0
    %v1014 = vmax.f32 %v1009, 0.0
    %v1015 = vmax.f32 %v1012, 0.0
    %v1016 = vperm.slane %v86, 7
    %1025 = vrot.lane.b32.xlu0 %v95, 64
    %v1026 = vpop.permute.xlu0 %1025
    %1027 = vrot.lane.b32.xlu0 %v96, 64
    %v1028 = vpop.permute.xlu0 %1027
    %1029 = vrot.lane.b32.xlu0 %v97, 64
    %v1030 = vpop.permute.xlu0 %1029
    %1031 = vrot.lane.b32.xlu0 %v98, 64
    %v1032 = vpop.permute.xlu0 %1031
    %1033 = vrot.lane.b32.xlu0 %v99, 64
    %v1034 = vpop.permute.xlu0 %1033
    %1035 = vrot.lane.b32.xlu0 %v100, 64
    %v1036 = vpop.permute.xlu0 %1035
    %1037 = vrot.lane.b32.xlu0 %v101, 64
    %v1038 = vpop.permute.xlu0 %1037
    %1039 = vrot.lane.b32.xlu0 %v102, 64
    %v1040 = vpop.permute.xlu0 %1039
    %vm1049 = vcmask 523264
    %v1051 = vsel %vm1049, %v1014, 0
    %v1054 = vsel %vm1049, %v1015, 0
    %1056 = vmatpush.msra.mxu0 0.0
    %1057 = vmatpush.msra.mxu0 0.0
    %1058 = vmatpush.msra.mxu0 0.0
    %1059 = vmatpush.msra.mxu0 0.0
    %1060 = vmatpush.msra.mxu0 0.0
    %1061 = vmatpush.msra.mxu0 0.0
    %1062 = vmatpush.msra.mxu0 0.0
    %1063 = vmatpush.msra.mxu0 0.0
    %1064 = vmatpush.msra.mxu0 %v1040
    %1065 = vmatpush.msra.mxu0 %v1038
    %1066 = vmatpush.msra.mxu0 %v1036
    %1067 = vmatpush.msra.mxu0 %v1034
    %1068 = vmatpush.msra.mxu0 %v1032
    %1069 = vmatpush.msra.mxu0 %v1030
    %1070 = vmatpush.msra.mxu0 %v1028
    %1071 = vmatpush.msra.mxu0 %v1026
    %1072 = vmatmul.f32.gmra.mxu0 %v1051
    %v1073 = vpop.f32.mrf.mxu0
    %v1074 = vadd.f32 %v1016, %v1073
    %1075 = vmatmul.f32.gmra.mxu0 %v1054
    %v1076 = vpop.f32.mrf.mxu0
    %v1077 = vadd.f32 %v1016, %v1076
    %1078 = vdwg.mxu0
    %v1079 = vadd.f32 %v1074, %v932
    %v1080 = vadd.f32 %v1077, %v933
    %1081 = vst.msk [vmem:[#allocation10] sm:$0xff] %vm103, %v1079
    %1082 = vst.msk [vmem:[#allocation10 + $0x8] sm:$0xff] %vm103, %v1080
    // Predicated region
    $region34: #{tpu_custom_call.1} parent=1 // pred_check
      _
    $region35: #{tpu_custom_call.1} parent=1 // pred_check_branch
      %1084 = sbr.rel (0) target = $region37
    $region36: #{tpu_custom_call.1} parent=1 // pred_region
      %1086 = vsyncadd [#allocation4], 0
      %s1087 = sshll.u32 [#allocation10], 4
      %s1088 = int_to_ptr.vmem [resolvable:$true] %s1087
      %s1089 = sshll.u32 %s4, 4
      %s1090 = int_to_ptr.hbm [resolvable:$true] %s1089
      %1095 = dma.vmem_to_hbm [thread:$0]  %s1088, 256, %s1090, [#allocation4], 128, 128, 8
    $region37: #{tpu_custom_call.1} parent=1 // pred_fallthru
      _
    // Predicated region
    $region38: #{tpu_custom_call.1} parent=1 // pred_check
      _
    $region39: #{tpu_custom_call.1} parent=1 // pred_check_branch
      %1097 = sbr.rel (0) target = $region41
    $region40: #{tpu_custom_call.1} parent=1 // pred_region
      %1099 = vsyncadd [#allocation12], 0
      %s1100 = sshll.u32 [#allocation11], 4
      %s1101 = int_to_ptr.vmem [resolvable:$true] %s1100
      %s1102 = sshll.u32 %s5, 4
      %s1103 = int_to_ptr.hbm [resolvable:$true] %s1102
      %1108 = dma.vmem_to_hbm [thread:$0]  %s1101, 256, %s1103, [#allocation12], 128, 128, 8
    $region41: #{tpu_custom_call.1} parent=1 // pred_fallthru
      _
    // Predicated region
    $region42: #{tpu_custom_call.1} parent=1 // pred_check
      _
    $region43: #{tpu_custom_call.1} parent=1 // pred_check_branch
      %1110 = sbr.rel (0) target = $region45
    $region44: #{tpu_custom_call.1} parent=1 // pred_region
      %1112 = dma.done [#allocation4], 256
    $region45: #{tpu_custom_call.1} parent=1 // pred_fallthru
      _
    // Predicated region
    $region46: #{tpu_custom_call.1} parent=1 // pred_check
      _
    $region47: #{tpu_custom_call.1} parent=1 // pred_check_branch
      %1114 = sbr.rel (0) target = $region49
    $region48: #{tpu_custom_call.1} parent=1 // pred_region
      %1116 = dma.done [#allocation12], 256
    $region49: #{tpu_custom_call.1} parent=1 // pred_fallthru
      _
    %1117 = vsyncpa [#allocation3], 1
    %1118 = vsyncpa [#allocation6], 1
    %1119 = vsyncpa [#allocation9], 1
    %1120 = vsyncpa [#allocation4], 1
    %1121 = vsyncpa [#allocation12], 1

</llo_original>
